<compile_context>
chip_gen: v6e
topology: v6e:2x2x1
jax: 0.10.0
libtpu: 0.0.40
codegen_flags: <defaults>
</compile_context>

<pallas_src>
import jax
import jax.numpy as jnp
from jax import lax
from jax.experimental import pallas as pl
from jax.experimental.pallas import tpu as pltpu

# ---- model hyperparameters (match the PyTorch module defaults) -------------
EMBEDDING_SIZE = 32
HIDDEN_LAYERS = (64, 32, 16, 8)            # first must equal 2 * embedding_size
OUTPUT_RANGE = (1, 5)
NORM_MIN = float(min(OUTPUT_RANGE))
NORM_RANGE = float(abs(OUTPUT_RANGE[0] - OUTPUT_RANGE[1]) + 1)   # = 5.0

GATHER_UNROLL = 8                          # rows handled per gather-loop body


def ncf_kernel(uid_ref, mid_ref,                      # SMEM scalar prefetch, (B_pad,) pre-hashed int32
               uemb_ref, memb_ref,                    # VMEM-pinned embedding tables (full shape)
               w1u_ref, w1m_ref, b1_ref,              # MLP params, VMEM-pinned
               w2_ref, b2_ref, w3_ref, b3_ref,
               w4t_ref, b4_ref,
               out_ref,                               # (1, 1, TILE_B) f32, lane-dense
               u_rows, m_rows):                       # VMEM scratch gather buffers
    tile_b = u_rows.shape[0]
    base = pl.program_id(0) * tile_b

    # ---- embedding gather: dynamic row reads from VMEM-resident tables -----
    # (ids already hashed in the wrapper; partial unroll amortizes loop and
    #  lets address calc for row k+1 co-issue with the load/store of row k)
    @pl.loop(0, tile_b // GATHER_UNROLL)
    def _gather(j):
        i0 = j * GATHER_UNROLL
        for k in range(GATHER_UNROLL):
            i = i0 + k
            u_rows[pl.ds(i, 1), :] = uemb_ref[pl.ds(uid_ref[base + i], 1), :]
            m_rows[pl.ds(i, 1), :] = memb_ref[pl.ds(mid_ref[base + i], 1), :]

    u = u_rows[...]                        # (TILE_B, E) f32
    m = m_rows[...]                        # (TILE_B, E) f32

    # ---- layer 1, concat-free: relu(u @ W1[:E] + m @ W1[E:] + b1) ----------
    x = jnp.dot(u, w1u_ref[...], preferred_element_type=jnp.float32)
    x = x + jnp.dot(m, w1m_ref[...], preferred_element_type=jnp.float32)
    x = jnp.maximum(x + b1_ref[...], 0.0)
    # ---- hidden layers ------------------------------------------------------
    x = jnp.maximum(jnp.dot(x, w2_ref[...], preferred_element_type=jnp.float32)
                    + b2_ref[...], 0.0)
    x = jnp.maximum(jnp.dot(x, w3_ref[...], preferred_element_type=jnp.float32)
                    + b3_ref[...], 0.0)

    # ---- final layer computed transposed -> lane-dense (1, TILE_B) ---------
    # w4t_ref is W4^T padded to (8, 8): row 0 holds the real weights, rest 0.
    yt_full = lax.dot_general(w4t_ref[...], x,
                              (((1,), (1,)), ((), ())),             # A @ B^T
                              preferred_element_type=jnp.float32)   # (8, TILE_B)
    yt = yt_full[0:1, :] + b4_ref[...]                              # (1, TILE_B)
    yt = jax.nn.sigmoid(yt) * NORM_RANGE + NORM_MIN
    out_ref[...] = yt.reshape(1, 1, tile_b)


def ncf_forward(user_id, movie_id, params, tile_b=None):
    """user_id, movie_id: int arrays of shape (B,). Returns (B, 1) float32."""
    batch = user_id.shape[0]
    uemb = params["user_emb"]
    memb = params["movie_emb"]
    user_count, E = uemb.shape
    movie_count = memb.shape[0]

    # 256 fills the v6e/v7x 256-tall MXU; fall back to 128 on small batches so
    # there are >= 2 grid tiles (both v7x TensorCores get work).
    if tile_b is None:
        tile_b = 256 if batch >= 2 * 256 else 128
    num_tiles = pl.cdiv(batch, tile_b)
    b_pad = num_tiles * tile_b

    # Hoist the id hashing out of the kernel; pad with row 0 (valid index).
    uid = jnp.pad(user_id.astype(jnp.int32) % user_count, (0, b_pad - batch))
    mid = jnp.pad(movie_id.astype(jnp.int32) % movie_count, (0, b_pad - batch))

    # Split W1 (concat elimination) and build the padded transposed W4.
    w1 = params["w1"]                       # (2E, H1)
    w1u, w1m = w1[:E], w1[E:]
    w4 = params["w4"]                       # (H3, 1)
    w4t = jnp.zeros((8, 8), jnp.float32).at[0, :].set(w4[:, 0])

    weight_ops = (w1u, w1m, params["b1"],
                  params["w2"], params["b2"],
                  params["w3"], params["b3"],
                  w4t, params["b4"])

    def pinned(arr):                        # whole array, resident across grid steps
        nd = arr.ndim
        return pl.BlockSpec(arr.shape, lambda i, u, m, nd=nd: (0,) * nd)

    grid_spec = pltpu.PrefetchScalarGridSpec(
        num_scalar_prefetch=2,
        grid=(num_tiles,),
        in_specs=[pinned(uemb), pinned(memb)]           # tables pinned in VMEM
                 + [pinned(w) for w in weight_ops],
        out_specs=pl.BlockSpec((1, 1, tile_b), lambda i, u, m: (i, 0, 0)),
        scratch_shapes=[pltpu.VMEM((tile_b, E), jnp.float32),
                        pltpu.VMEM((tile_b, E), jnp.float32)],
    )

    out = pl.pallas_call(
        ncf_kernel,
        out_shape=jax.ShapeDtypeStruct((num_tiles, 1, tile_b), jnp.float32),
        grid_spec=grid_spec,
        compiler_params=pltpu.CompilerParams(
            dimension_semantics=("parallel",)),
    )(uid, mid, uemb, memb, *weight_ops)

    return out.reshape(-1)[:batch].reshape(batch, 1)


def ncf_reference(user_id, movie_id, params):
    """Plain-JAX forward for correctness checking."""
    u = params["user_emb"][user_id % params["user_emb"].shape[0]]
    m = params["movie_emb"][movie_id % params["movie_emb"].shape[0]]
    x = jnp.concatenate([u, m], axis=1)
    x = jax.nn.relu(x @ params["w1"] + params["b1"])
    x = jax.nn.relu(x @ params["w2"] + params["b2"])
    x = jax.nn.relu(x @ params["w3"] + params["b3"])
    x = jax.nn.sigmoid(x @ params["w4"] + params["b4"])
    return x * NORM_RANGE + NORM_MIN


def init_params(key, user_count, movie_count,
                embedding_size=EMBEDDING_SIZE, hidden_layers=HIDDEN_LAYERS):
    assert embedding_size * 2 == hidden_layers[0]
    keys = jax.random.split(key, 6)

    def xavier_uniform(k, fan_in, fan_out):
        bound = jnp.sqrt(6.0 / (fan_in + fan_out))
        # stored as (in, out) so forward computes x @ W + b
        return jax.random.uniform(k, (fan_in, fan_out), jnp.float32, -bound, bound)

    params = {
        "user_emb": jax.random.uniform(keys[0], (user_count, embedding_size),
                                       jnp.float32, -0.05, 0.05),
        "movie_emb": jax.random.uniform(keys[1], (movie_count, embedding_size),
                                        jnp.float32, -0.05, 0.05),
    }
    dims = list(hidden_layers) + [1]        # 64 -> 32 -> 16 -> 8 -> 1
    for i in range(4):
        params[f"w{i+1}"] = xavier_uniform(keys[2 + i], dims[i], dims[i + 1])
        params[f"b{i+1}"] = jnp.full((1, dims[i + 1]), 0.01, jnp.float32)
    return params


if __name__ == "__main__":
    USER_COUNT = 300
    MOVIE_COUNT = 500
    BATCH = 200                             # not a multiple of 128 -> exercises padding

    key = jax.random.PRNGKey(0)
    k_params, k_uid, k_mid = jax.random.split(key, 3)

    params = init_params(k_params, USER_COUNT, MOVIE_COUNT)

    # ids may exceed the hash size — forward applies `% hash_size`
    user_id = jax.random.randint(k_uid, (BATCH,), 0, 10 * USER_COUNT, jnp.int32)
    movie_id = jax.random.randint(k_mid, (BATCH,), 0, 10 * MOVIE_COUNT, jnp.int32)

    out = ncf_forward(user_id, movie_id, params)
    out = jax.block_until_ready(out)

    assert out.shape == (BATCH, 1)
    assert bool(jnp.all(jnp.isfinite(out)))

    ref = ncf_reference(user_id, movie_id, params)
    assert bool(jnp.allclose(out, ref, atol=1e-3, rtol=1e-3)), "mismatch vs reference"

    print("KERNEL_OK")
</pallas_src>

<mosaic_0001>
module attributes {stable_mosaic.version = 11 : i64} {
  func.func @ncf_kernel(%arg0: i32, %arg1: memref<256xi32, #tpu.memory_space<smem>>, %arg2: memref<256xi32, #tpu.memory_space<smem>>, %arg3: memref<300x32xf32, #tpu.memory_space<vmem>>, %arg4: memref<500x32xf32, #tpu.memory_space<vmem>>, %arg5: memref<32x32xf32, #tpu.memory_space<vmem>>, %arg6: memref<32x32xf32, #tpu.memory_space<vmem>>, %arg7: memref<1x32xf32, #tpu.memory_space<vmem>>, %arg8: memref<32x16xf32, #tpu.memory_space<vmem>>, %arg9: memref<1x16xf32, #tpu.memory_space<vmem>>, %arg10: memref<16x8xf32, #tpu.memory_space<vmem>>, %arg11: memref<1x8xf32, #tpu.memory_space<vmem>>, %arg12: memref<8x8xf32, #tpu.memory_space<vmem>>, %arg13: memref<1x1xf32, #tpu.memory_space<vmem>>, %arg14: memref<1x1x128xf32, #tpu.memory_space<vmem>>, %arg15: memref<128x32xf32, #tpu.memory_space<vmem>>, %arg16: memref<128x32xf32, #tpu.memory_space<vmem>>) attributes {dimension_semantics = [#tpu.dimension_semantics<parallel>], iteration_bounds = array<i64: 2>, scalar_prefetch = 2 : i64, scratch_operands = 2 : i64, tpu.core_type = #tpu.core_type<tc>, window_params = [{pipeline_mode = #tpu.pipeline_mode<synchronous>, transform_indices = @transform_0, window_bounds = array<i64: 300, 32>}, {pipeline_mode = #tpu.pipeline_mode<synchronous>, transform_indices = @transform_1, window_bounds = array<i64: 500, 32>}, {pipeline_mode = #tpu.pipeline_mode<synchronous>, transform_indices = @transform_2, window_bounds = array<i64: 32, 32>}, {pipeline_mode = #tpu.pipeline_mode<synchronous>, transform_indices = @transform_3, window_bounds = array<i64: 32, 32>}, {pipeline_mode = #tpu.pipeline_mode<synchronous>, transform_indices = @transform_4, window_bounds = array<i64: 1, 32>}, {pipeline_mode = #tpu.pipeline_mode<synchronous>, transform_indices = @transform_5, window_bounds = array<i64: 32, 16>}, {pipeline_mode = #tpu.pipeline_mode<synchronous>, transform_indices = @transform_6, window_bounds = array<i64: 1, 16>}, {pipeline_mode = #tpu.pipeline_mode<synchronous>, transform_indices = @transform_7, window_bounds = array<i64: 16, 8>}, {pipeline_mode = #tpu.pipeline_mode<synchronous>, transform_indices = @transform_8, window_bounds = array<i64: 1, 8>}, {pipeline_mode = #tpu.pipeline_mode<synchronous>, transform_indices = @transform_9, window_bounds = array<i64: 8, 8>}, {pipeline_mode = #tpu.pipeline_mode<synchronous>, transform_indices = @transform_10, window_bounds = array<i64: 1, 1>}, {transform_indices = @transform_11, window_bounds = array<i64: 1, 1, 128>}]} {
    %c128_i32 = arith.constant 128 : i32
    %0 = arith.muli %arg0, %c128_i32 : i32
    %c0_i32 = arith.constant 0 : i32
    %c16_i32 = arith.constant 16 : i32
    %1 = arith.addi %c0_i32, %c16_i32 : i32
    %c1_i32 = arith.constant 1 : i32
    scf.for %arg17 = %c0_i32 to %1 step %c1_i32  : i32 {
      %c1_i32_35 = arith.constant 1 : i32
      %45 = arith.muli %arg17, %c1_i32_35 : i32
      %c0_i32_36 = arith.constant 0 : i32
      %46 = arith.addi %c0_i32_36, %45 : i32
      %c8_i32 = arith.constant 8 : i32
      %47 = arith.muli %46, %c8_i32 : i32
      %c0_i32_37 = arith.constant 0 : i32
      %48 = arith.addi %47, %c0_i32_37 : i32
      %49 = arith.addi %0, %48 : i32
      %50 = arith.index_cast %49 : i32 to index
      %51 = memref.load %arg1[%50] : memref<256xi32, #tpu.memory_space<smem>>
      %52 = arith.index_cast %51 : i32 to index
      %c0_38 = arith.constant 0 : index
      %53 = vector.load %arg3[%52, %c0_38] : memref<300x32xf32, #tpu.memory_space<vmem>>, vector<1x32xf32>
      %54 = arith.index_cast %48 : i32 to index
      %c0_39 = arith.constant 0 : index
      %55 = vector.load %arg15[%54, %c0_39] : memref<128x32xf32, #tpu.memory_space<vmem>>, vector<1x32xf32>
      tpu.vector_store %arg15[%54, %c0_39], %53 {strides = array<i32>} : memref<128x32xf32, #tpu.memory_space<vmem>>, vector<1x32xf32>,
      %56 = arith.addi %0, %48 : i32
      %57 = arith.index_cast %56 : i32 to index
      %58 = memref.load %arg2[%57] : memref<256xi32, #tpu.memory_space<smem>>
      %59 = arith.index_cast %58 : i32 to index
      %c0_40 = arith.constant 0 : index
      %60 = vector.load %arg4[%59, %c0_40] : memref<500x32xf32, #tpu.memory_space<vmem>>, vector<1x32xf32>
      %61 = arith.index_cast %48 : i32 to index
      %c0_41 = arith.constant 0 : index
      %62 = vector.load %arg16[%61, %c0_41] : memref<128x32xf32, #tpu.memory_space<vmem>>, vector<1x32xf32>
      tpu.vector_store %arg16[%61, %c0_41], %60 {strides = array<i32>} : memref<128x32xf32, #tpu.memory_space<vmem>>, vector<1x32xf32>,
      %c1_i32_42 = arith.constant 1 : i32
      %63 = arith.addi %47, %c1_i32_42 : i32
      %64 = arith.addi %0, %63 : i32
      %65 = arith.index_cast %64 : i32 to index
      %66 = memref.load %arg1[%65] : memref<256xi32, #tpu.memory_space<smem>>
      %67 = arith.index_cast %66 : i32 to index
      %c0_43 = arith.constant 0 : index
      %68 = vector.load %arg3[%67, %c0_43] : memref<300x32xf32, #tpu.memory_space<vmem>>, vector<1x32xf32>
      %69 = arith.index_cast %63 : i32 to index
      %c0_44 = arith.constant 0 : index
      %70 = vector.load %arg15[%69, %c0_44] : memref<128x32xf32, #tpu.memory_space<vmem>>, vector<1x32xf32>
      tpu.vector_store %arg15[%69, %c0_44], %68 {strides = array<i32>} : memref<128x32xf32, #tpu.memory_space<vmem>>, vector<1x32xf32>,
      %71 = arith.addi %0, %63 : i32
      %72 = arith.index_cast %71 : i32 to index
      %73 = memref.load %arg2[%72] : memref<256xi32, #tpu.memory_space<smem>>
      %74 = arith.index_cast %73 : i32 to index
      %c0_45 = arith.constant 0 : index
      %75 = vector.load %arg4[%74, %c0_45] : memref<500x32xf32, #tpu.memory_space<vmem>>, vector<1x32xf32>
      %76 = arith.index_cast %63 : i32 to index
      %c0_46 = arith.constant 0 : index
      %77 = vector.load %arg16[%76, %c0_46] : memref<128x32xf32, #tpu.memory_space<vmem>>, vector<1x32xf32>
      tpu.vector_store %arg16[%76, %c0_46], %75 {strides = array<i32>} : memref<128x32xf32, #tpu.memory_space<vmem>>, vector<1x32xf32>,
      %c2_i32 = arith.constant 2 : i32
      %78 = arith.addi %47, %c2_i32 : i32
      %79 = arith.addi %0, %78 : i32
      %80 = arith.index_cast %79 : i32 to index
      %81 = memref.load %arg1[%80] : memref<256xi32, #tpu.memory_space<smem>>
      %82 = arith.index_cast %81 : i32 to index
      %c0_47 = arith.constant 0 : index
      %83 = vector.load %arg3[%82, %c0_47] : memref<300x32xf32, #tpu.memory_space<vmem>>, vector<1x32xf32>
      %84 = arith.index_cast %78 : i32 to index
      %c0_48 = arith.constant 0 : index
      %85 = vector.load %arg15[%84, %c0_48] : memref<128x32xf32, #tpu.memory_space<vmem>>, vector<1x32xf32>
      tpu.vector_store %arg15[%84, %c0_48], %83 {strides = array<i32>} : memref<128x32xf32, #tpu.memory_space<vmem>>, vector<1x32xf32>,
      %86 = arith.addi %0, %78 : i32
      %87 = arith.index_cast %86 : i32 to index
      %88 = memref.load %arg2[%87] : memref<256xi32, #tpu.memory_space<smem>>
      %89 = arith.index_cast %88 : i32 to index
      %c0_49 = arith.constant 0 : index
      %90 = vector.load %arg4[%89, %c0_49] : memref<500x32xf32, #tpu.memory_space<vmem>>, vector<1x32xf32>
      %91 = arith.index_cast %78 : i32 to index
      %c0_50 = arith.constant 0 : index
      %92 = vector.load %arg16[%91, %c0_50] : memref<128x32xf32, #tpu.memory_space<vmem>>, vector<1x32xf32>
      tpu.vector_store %arg16[%91, %c0_50], %90 {strides = array<i32>} : memref<128x32xf32, #tpu.memory_space<vmem>>, vector<1x32xf32>,
      %c3_i32 = arith.constant 3 : i32
      %93 = arith.addi %47, %c3_i32 : i32
      %94 = arith.addi %0, %93 : i32
      %95 = arith.index_cast %94 : i32 to index
      %96 = memref.load %arg1[%95] : memref<256xi32, #tpu.memory_space<smem>>
      %97 = arith.index_cast %96 : i32 to index
      %c0_51 = arith.constant 0 : index
      %98 = vector.load %arg3[%97, %c0_51] : memref<300x32xf32, #tpu.memory_space<vmem>>, vector<1x32xf32>
      %99 = arith.index_cast %93 : i32 to index
      %c0_52 = arith.constant 0 : index
      %100 = vector.load %arg15[%99, %c0_52] : memref<128x32xf32, #tpu.memory_space<vmem>>, vector<1x32xf32>
      tpu.vector_store %arg15[%99, %c0_52], %98 {strides = array<i32>} : memref<128x32xf32, #tpu.memory_space<vmem>>, vector<1x32xf32>,
      %101 = arith.addi %0, %93 : i32
      %102 = arith.index_cast %101 : i32 to index
      %103 = memref.load %arg2[%102] : memref<256xi32, #tpu.memory_space<smem>>
      %104 = arith.index_cast %103 : i32 to index
      %c0_53 = arith.constant 0 : index
      %105 = vector.load %arg4[%104, %c0_53] : memref<500x32xf32, #tpu.memory_space<vmem>>, vector<1x32xf32>
      %106 = arith.index_cast %93 : i32 to index
      %c0_54 = arith.constant 0 : index
      %107 = vector.load %arg16[%106, %c0_54] : memref<128x32xf32, #tpu.memory_space<vmem>>, vector<1x32xf32>
      tpu.vector_store %arg16[%106, %c0_54], %105 {strides = array<i32>} : memref<128x32xf32, #tpu.memory_space<vmem>>, vector<1x32xf32>,
      %c4_i32 = arith.constant 4 : i32
      %108 = arith.addi %47, %c4_i32 : i32
      %109 = arith.addi %0, %108 : i32
      %110 = arith.index_cast %109 : i32 to index
      %111 = memref.load %arg1[%110] : memref<256xi32, #tpu.memory_space<smem>>
      %112 = arith.index_cast %111 : i32 to index
      %c0_55 = arith.constant 0 : index
      %113 = vector.load %arg3[%112, %c0_55] : memref<300x32xf32, #tpu.memory_space<vmem>>, vector<1x32xf32>
      %114 = arith.index_cast %108 : i32 to index
      %c0_56 = arith.constant 0 : index
      %115 = vector.load %arg15[%114, %c0_56] : memref<128x32xf32, #tpu.memory_space<vmem>>, vector<1x32xf32>
      tpu.vector_store %arg15[%114, %c0_56], %113 {strides = array<i32>} : memref<128x32xf32, #tpu.memory_space<vmem>>, vector<1x32xf32>,
      %116 = arith.addi %0, %108 : i32
      %117 = arith.index_cast %116 : i32 to index
      %118 = memref.load %arg2[%117] : memref<256xi32, #tpu.memory_space<smem>>
      %119 = arith.index_cast %118 : i32 to index
      %c0_57 = arith.constant 0 : index
      %120 = vector.load %arg4[%119, %c0_57] : memref<500x32xf32, #tpu.memory_space<vmem>>, vector<1x32xf32>
      %121 = arith.index_cast %108 : i32 to index
      %c0_58 = arith.constant 0 : index
      %122 = vector.load %arg16[%121, %c0_58] : memref<128x32xf32, #tpu.memory_space<vmem>>, vector<1x32xf32>
      tpu.vector_store %arg16[%121, %c0_58], %120 {strides = array<i32>} : memref<128x32xf32, #tpu.memory_space<vmem>>, vector<1x32xf32>,
      %c5_i32 = arith.constant 5 : i32
      %123 = arith.addi %47, %c5_i32 : i32
      %124 = arith.addi %0, %123 : i32
      %125 = arith.index_cast %124 : i32 to index
      %126 = memref.load %arg1[%125] : memref<256xi32, #tpu.memory_space<smem>>
      %127 = arith.index_cast %126 : i32 to index
      %c0_59 = arith.constant 0 : index
      %128 = vector.load %arg3[%127, %c0_59] : memref<300x32xf32, #tpu.memory_space<vmem>>, vector<1x32xf32>
      %129 = arith.index_cast %123 : i32 to index
      %c0_60 = arith.constant 0 : index
      %130 = vector.load %arg15[%129, %c0_60] : memref<128x32xf32, #tpu.memory_space<vmem>>, vector<1x32xf32>
      tpu.vector_store %arg15[%129, %c0_60], %128 {strides = array<i32>} : memref<128x32xf32, #tpu.memory_space<vmem>>, vector<1x32xf32>,
      %131 = arith.addi %0, %123 : i32
      %132 = arith.index_cast %131 : i32 to index
      %133 = memref.load %arg2[%132] : memref<256xi32, #tpu.memory_space<smem>>
      %134 = arith.index_cast %133 : i32 to index
      %c0_61 = arith.constant 0 : index
      %135 = vector.load %arg4[%134, %c0_61] : memref<500x32xf32, #tpu.memory_space<vmem>>, vector<1x32xf32>
      %136 = arith.index_cast %123 : i32 to index
      %c0_62 = arith.constant 0 : index
      %137 = vector.load %arg16[%136, %c0_62] : memref<128x32xf32, #tpu.memory_space<vmem>>, vector<1x32xf32>
      tpu.vector_store %arg16[%136, %c0_62], %135 {strides = array<i32>} : memref<128x32xf32, #tpu.memory_space<vmem>>, vector<1x32xf32>,
      %c6_i32 = arith.constant 6 : i32
      %138 = arith.addi %47, %c6_i32 : i32
      %139 = arith.addi %0, %138 : i32
      %140 = arith.index_cast %139 : i32 to index
      %141 = memref.load %arg1[%140] : memref<256xi32, #tpu.memory_space<smem>>
      %142 = arith.index_cast %141 : i32 to index
      %c0_63 = arith.constant 0 : index
      %143 = vector.load %arg3[%142, %c0_63] : memref<300x32xf32, #tpu.memory_space<vmem>>, vector<1x32xf32>
      %144 = arith.index_cast %138 : i32 to index
      %c0_64 = arith.constant 0 : index
      %145 = vector.load %arg15[%144, %c0_64] : memref<128x32xf32, #tpu.memory_space<vmem>>, vector<1x32xf32>
      tpu.vector_store %arg15[%144, %c0_64], %143 {strides = array<i32>} : memref<128x32xf32, #tpu.memory_space<vmem>>, vector<1x32xf32>,
      %146 = arith.addi %0, %138 : i32
      %147 = arith.index_cast %146 : i32 to index
      %148 = memref.load %arg2[%147] : memref<256xi32, #tpu.memory_space<smem>>
      %149 = arith.index_cast %148 : i32 to index
      %c0_65 = arith.constant 0 : index
      %150 = vector.load %arg4[%149, %c0_65] : memref<500x32xf32, #tpu.memory_space<vmem>>, vector<1x32xf32>
      %151 = arith.index_cast %138 : i32 to index
      %c0_66 = arith.constant 0 : index
      %152 = vector.load %arg16[%151, %c0_66] : memref<128x32xf32, #tpu.memory_space<vmem>>, vector<1x32xf32>
      tpu.vector_store %arg16[%151, %c0_66], %150 {strides = array<i32>} : memref<128x32xf32, #tpu.memory_space<vmem>>, vector<1x32xf32>,
      %c7_i32 = arith.constant 7 : i32
      %153 = arith.addi %47, %c7_i32 : i32
      %154 = arith.addi %0, %153 : i32
      %155 = arith.index_cast %154 : i32 to index
      %156 = memref.load %arg1[%155] : memref<256xi32, #tpu.memory_space<smem>>
      %157 = arith.index_cast %156 : i32 to index
      %c0_67 = arith.constant 0 : index
      %158 = vector.load %arg3[%157, %c0_67] : memref<300x32xf32, #tpu.memory_space<vmem>>, vector<1x32xf32>
      %159 = arith.index_cast %153 : i32 to index
      %c0_68 = arith.constant 0 : index
      %160 = vector.load %arg15[%159, %c0_68] : memref<128x32xf32, #tpu.memory_space<vmem>>, vector<1x32xf32>
      tpu.vector_store %arg15[%159, %c0_68], %158 {strides = array<i32>} : memref<128x32xf32, #tpu.memory_space<vmem>>, vector<1x32xf32>,
      %161 = arith.addi %0, %153 : i32
      %162 = arith.index_cast %161 : i32 to index
      %163 = memref.load %arg2[%162] : memref<256xi32, #tpu.memory_space<smem>>
      %164 = arith.index_cast %163 : i32 to index
      %c0_69 = arith.constant 0 : index
      %165 = vector.load %arg4[%164, %c0_69] : memref<500x32xf32, #tpu.memory_space<vmem>>, vector<1x32xf32>
      %166 = arith.index_cast %153 : i32 to index
      %c0_70 = arith.constant 0 : index
      %167 = vector.load %arg16[%166, %c0_70] : memref<128x32xf32, #tpu.memory_space<vmem>>, vector<1x32xf32>
      tpu.vector_store %arg16[%166, %c0_70], %165 {strides = array<i32>} : memref<128x32xf32, #tpu.memory_space<vmem>>, vector<1x32xf32>,
    }
    %c16_i32_0 = arith.constant 16 : i32
    %c0 = arith.constant 0 : index
    %c0_1 = arith.constant 0 : index
    %2 = vector.load %arg15[%c0, %c0_1] : memref<128x32xf32, #tpu.memory_space<vmem>>, vector<128x32xf32>
    %c0_2 = arith.constant 0 : index
    %c0_3 = arith.constant 0 : index
    %3 = vector.load %arg16[%c0_2, %c0_3] : memref<128x32xf32, #tpu.memory_space<vmem>>, vector<128x32xf32>
    %c0_4 = arith.constant 0 : index
    %c0_5 = arith.constant 0 : index
    %4 = vector.load %arg5[%c0_4, %c0_5] : memref<32x32xf32, #tpu.memory_space<vmem>>, vector<32x32xf32>
    %cst = arith.constant dense<0.000000e+00> : vector<128x32xf32>
    %5 = tpu.matmul %2, %4, %cst {dimension_numbers = #tpu.dot_dimension_numbers<[1], [0], [0], [1], [0, 0, 1, 1], [], []>} : vector<128x32xf32>, vector<32x32xf32>, vector<128x32xf32> -> vector<128x32xf32>
    %c0_6 = arith.constant 0 : index
    %c0_7 = arith.constant 0 : index
    %6 = vector.load %arg6[%c0_6, %c0_7] : memref<32x32xf32, #tpu.memory_space<vmem>>, vector<32x32xf32>
    %cst_8 = arith.constant dense<0.000000e+00> : vector<128x32xf32>
    %7 = tpu.matmul %3, %6, %cst_8 {dimension_numbers = #tpu.dot_dimension_numbers<[1], [0], [0], [1], [0, 0, 1, 1], [], []>} : vector<128x32xf32>, vector<32x32xf32>, vector<128x32xf32> -> vector<128x32xf32>
    %8 = arith.addf %5, %7 : vector<128x32xf32>
    %c0_9 = arith.constant 0 : index
    %c0_10 = arith.constant 0 : index
    %9 = vector.load %arg7[%c0_9, %c0_10] : memref<1x32xf32, #tpu.memory_space<vmem>>, vector<1x32xf32>
    %10 = vector.broadcast %9 : vector<1x32xf32> to vector<128x32xf32>
    %11 = arith.addf %8, %10 : vector<128x32xf32>
    %cst_11 = arith.constant 0.000000e+00 : f32
    %12 = vector.broadcast %cst_11 : f32 to vector<128x32xf32>
    %13 = arith.maximumf %11, %12 : vector<128x32xf32>
    %c0_12 = arith.constant 0 : index
    %c0_13 = arith.constant 0 : index
    %14 = vector.load %arg8[%c0_12, %c0_13] : memref<32x16xf32, #tpu.memory_space<vmem>>, vector<32x16xf32>
    %cst_14 = arith.constant dense<0.000000e+00> : vector<128x16xf32>
    %15 = tpu.matmul %13, %14, %cst_14 {dimension_numbers = #tpu.dot_dimension_numbers<[1], [0], [0], [1], [0, 0, 1, 1], [], []>} : vector<128x32xf32>, vector<32x16xf32>, vector<128x16xf32> -> vector<128x16xf32>
    %c0_15 = arith.constant 0 : index
    %c0_16 = arith.constant 0 : index
    %16 = vector.load %arg9[%c0_15, %c0_16] : memref<1x16xf32, #tpu.memory_space<vmem>>, vector<1x16xf32>
    %17 = vector.broadcast %16 : vector<1x16xf32> to vector<128x16xf32>
    %18 = arith.addf %15, %17 : vector<128x16xf32>
    %cst_17 = arith.constant 0.000000e+00 : f32
    %19 = vector.broadcast %cst_17 : f32 to vector<128x16xf32>
    %20 = arith.maximumf %18, %19 : vector<128x16xf32>
    %c0_18 = arith.constant 0 : index
    %c0_19 = arith.constant 0 : index
    %21 = vector.load %arg10[%c0_18, %c0_19] : memref<16x8xf32, #tpu.memory_space<vmem>>, vector<16x8xf32>
    %cst_20 = arith.constant dense<0.000000e+00> : vector<128x8xf32>
    %22 = tpu.matmul %20, %21, %cst_20 {dimension_numbers = #tpu.dot_dimension_numbers<[1], [0], [0], [1], [0, 0, 1, 1], [], []>} : vector<128x16xf32>, vector<16x8xf32>, vector<128x8xf32> -> vector<128x8xf32>
    %c0_21 = arith.constant 0 : index
    %c0_22 = arith.constant 0 : index
    %23 = vector.load %arg11[%c0_21, %c0_22] : memref<1x8xf32, #tpu.memory_space<vmem>>, vector<1x8xf32>
    %24 = vector.broadcast %23 : vector<1x8xf32> to vector<128x8xf32>
    %25 = arith.addf %22, %24 : vector<128x8xf32>
    %cst_23 = arith.constant 0.000000e+00 : f32
    %26 = vector.broadcast %cst_23 : f32 to vector<128x8xf32>
    %27 = arith.maximumf %25, %26 : vector<128x8xf32>
    %c0_24 = arith.constant 0 : index
    %c0_25 = arith.constant 0 : index
    %28 = vector.load %arg12[%c0_24, %c0_25] : memref<8x8xf32, #tpu.memory_space<vmem>>, vector<8x8xf32>
    %cst_26 = arith.constant dense<0.000000e+00> : vector<8x128xf32>
    %29 = tpu.matmul %28, %27, %cst_26 {dimension_numbers = #tpu.dot_dimension_numbers<[1], [1], [0], [0], [0, 0, 1, 0], [], []>} : vector<8x8xf32>, vector<128x8xf32>, vector<8x128xf32> -> vector<8x128xf32>
    %30 = vector.extract_strided_slice %29 {offsets = [0, 0], sizes = [1, 128], strides = [1, 1]} : vector<8x128xf32> to vector<1x128xf32>
    %c0_27 = arith.constant 0 : index
    %c0_28 = arith.constant 0 : index
    %31 = vector.load %arg13[%c0_27, %c0_28] : memref<1x1xf32, #tpu.memory_space<vmem>>, vector<1x1xf32>
    %32 = vector.broadcast %31 : vector<1x1xf32> to vector<1x128xf32>
    %33 = arith.addf %30, %32 : vector<1x128xf32>
    %34 = arith.negf %33 : vector<1x128xf32>
    %35 = math.exp %34 : vector<1x128xf32>
    %cst_29 = arith.constant 1.000000e+00 : f32
    %36 = vector.broadcast %cst_29 : f32 to vector<1x128xf32>
    %37 = arith.addf %36, %35 : vector<1x128xf32>
    %38 = arith.divf %36, %37 : vector<1x128xf32>
    %cst_30 = arith.constant 5.000000e+00 : f32
    %39 = vector.broadcast %cst_30 : f32 to vector<1x128xf32>
    %40 = arith.mulf %38, %39 : vector<1x128xf32>
    %cst_31 = arith.constant 1.000000e+00 : f32
    %41 = vector.broadcast %cst_31 : f32 to vector<1x128xf32>
    %42 = arith.addf %40, %41 : vector<1x128xf32>
    %43 = vector.shape_cast %42 : vector<1x128xf32> to vector<1x1x128xf32>
    %c0_32 = arith.constant 0 : index
    %c0_33 = arith.constant 0 : index
    %c0_34 = arith.constant 0 : index
    %44 = vector.load %arg14[%c0_32, %c0_33, %c0_34] : memref<1x1x128xf32, #tpu.memory_space<vmem>>, vector<1x1x128xf32>
    tpu.vector_store %arg14[%c0_32, %c0_33, %c0_34], %43 {strides = array<i32>} : memref<1x1x128xf32, #tpu.memory_space<vmem>>, vector<1x1x128xf32>,
    return
  }
  func.func @transform_0(%arg0: i32, %arg1: memref<256xi32, #tpu.memory_space<smem>>, %arg2: memref<256xi32, #tpu.memory_space<smem>>) -> (i32, i32) {
    %c0_i32 = arith.constant 0 : i32
    %c0_i32_0 = arith.constant 0 : i32
    %c0_i32_1 = arith.constant 0 : i32
    return %c0_i32, %c0_i32_0 : i32, i32
  }
  func.func @transform_1(%arg0: i32, %arg1: memref<256xi32, #tpu.memory_space<smem>>, %arg2: memref<256xi32, #tpu.memory_space<smem>>) -> (i32, i32) {
    %c0_i32 = arith.constant 0 : i32
    %c0_i32_0 = arith.constant 0 : i32
    %c0_i32_1 = arith.constant 0 : i32
    return %c0_i32, %c0_i32_0 : i32, i32
  }
  func.func @transform_2(%arg0: i32, %arg1: memref<256xi32, #tpu.memory_space<smem>>, %arg2: memref<256xi32, #tpu.memory_space<smem>>) -> (i32, i32) {
    %c0_i32 = arith.constant 0 : i32
    %c0_i32_0 = arith.constant 0 : i32
    %c0_i32_1 = arith.constant 0 : i32
    return %c0_i32, %c0_i32_0 : i32, i32
  }
  func.func @transform_3(%arg0: i32, %arg1: memref<256xi32, #tpu.memory_space<smem>>, %arg2: memref<256xi32, #tpu.memory_space<smem>>) -> (i32, i32) {
    %c0_i32 = arith.constant 0 : i32
    %c0_i32_0 = arith.constant 0 : i32
    %c0_i32_1 = arith.constant 0 : i32
    return %c0_i32, %c0_i32_0 : i32, i32
  }
  func.func @transform_4(%arg0: i32, %arg1: memref<256xi32, #tpu.memory_space<smem>>, %arg2: memref<256xi32, #tpu.memory_space<smem>>) -> (i32, i32) {
    %c0_i32 = arith.constant 0 : i32
    %c0_i32_0 = arith.constant 0 : i32
    %c0_i32_1 = arith.constant 0 : i32
    return %c0_i32, %c0_i32_0 : i32, i32
  }
  func.func @transform_5(%arg0: i32, %arg1: memref<256xi32, #tpu.memory_space<smem>>, %arg2: memref<256xi32, #tpu.memory_space<smem>>) -> (i32, i32) {
    %c0_i32 = arith.constant 0 : i32
    %c0_i32_0 = arith.constant 0 : i32
    %c0_i32_1 = arith.constant 0 : i32
    return %c0_i32, %c0_i32_0 : i32, i32
  }
  func.func @transform_6(%arg0: i32, %arg1: memref<256xi32, #tpu.memory_space<smem>>, %arg2: memref<256xi32, #tpu.memory_space<smem>>) -> (i32, i32) {
    %c0_i32 = arith.constant 0 : i32
    %c0_i32_0 = arith.constant 0 : i32
    %c0_i32_1 = arith.constant 0 : i32
    return %c0_i32, %c0_i32_0 : i32, i32
  }
  func.func @transform_7(%arg0: i32, %arg1: memref<256xi32, #tpu.memory_space<smem>>, %arg2: memref<256xi32, #tpu.memory_space<smem>>) -> (i32, i32) {
    %c0_i32 = arith.constant 0 : i32
    %c0_i32_0 = arith.constant 0 : i32
    %c0_i32_1 = arith.constant 0 : i32
    return %c0_i32, %c0_i32_0 : i32, i32
  }
  func.func @transform_8(%arg0: i32, %arg1: memref<256xi32, #tpu.memory_space<smem>>, %arg2: memref<256xi32, #tpu.memory_space<smem>>) -> (i32, i32) {
    %c0_i32 = arith.constant 0 : i32
    %c0_i32_0 = arith.constant 0 : i32
    %c0_i32_1 = arith.constant 0 : i32
    return %c0_i32, %c0_i32_0 : i32, i32
  }
  func.func @transform_9(%arg0: i32, %arg1: memref<256xi32, #tpu.memory_space<smem>>, %arg2: memref<256xi32, #tpu.memory_space<smem>>) -> (i32, i32) {
    %c0_i32 = arith.constant 0 : i32
    %c0_i32_0 = arith.constant 0 : i32
    %c0_i32_1 = arith.constant 0 : i32
    return %c0_i32, %c0_i32_0 : i32, i32
  }
  func.func @transform_10(%arg0: i32, %arg1: memref<256xi32, #tpu.memory_space<smem>>, %arg2: memref<256xi32, #tpu.memory_space<smem>>) -> (i32, i32) {
    %c0_i32 = arith.constant 0 : i32
    %c0_i32_0 = arith.constant 0 : i32
    %c0_i32_1 = arith.constant 0 : i32
    return %c0_i32, %c0_i32_0 : i32, i32
  }
  func.func @transform_11(%arg0: i32, %arg1: memref<256xi32, #tpu.memory_space<smem>>, %arg2: memref<256xi32, #tpu.memory_space<smem>>) -> (i32, i32, i32) {
    %c0_i32 = arith.constant 0 : i32
    %c0_i32_0 = arith.constant 0 : i32
    %c0_i32_1 = arith.constant 0 : i32
    return %arg0, %c0_i32, %c0_i32_0 : i32, i32, i32
  }
}

</mosaic_0001>

<llo_original>
// kernel: tpu_custom_call.1
$region0: #{tpu_custom_call.1}
  #allocation0 [shape = 'u32[]', space=smem, size = 0x4, offset = 0x4, fixed_abs, tag = 'smem constant byte address 0x4 - core index']
  #allocation1 [shape = 'u32[144,128]{1,0:T(1,128)}', space=vmem, size = 0x12000, scoped, tag = 'internal scratch']
  #allocation2 [shape = 'f32[128,32]{1,0:T(8,128)}', space=vmem, size = 0x10000, scoped, tag = 'scratch operand']
  #allocation3 [shape = 'f32[128,32]{1,0:T(8,128)}', space=vmem, size = 0x10000, scoped, tag = 'scratch operand']
  #allocation4 [shape = 's32[1]{0}', space=sflag, size = 0x4, scoped, tag = 'scoped memory for tpu_custom_call.1']
  #allocation5 [shape = 'u8[1024]{0}', space=smem, size = 0x400, scoped, tag = 'prefetched SMEM operand 0']
  #allocation6 [shape = 'u8[1024]{0}', space=smem, size = 0x400, scoped, tag = 'prefetched SMEM operand 1']
  #allocation7 [shape = 'f32[1,1]{1,0:T(1,128)S(1)}', space=vmem, size = 0x200, scoped, tag = 'scoped memory for tpu_custom_call.1']
  %s0 = inlined_call_operand.vmem [shape: s32[256], index: 0, kind: input, shape index: {}]
  %s1 = inlined_call_operand.vmem [shape: s32[256], index: 1, kind: input, shape index: {}]
  %s2 = inlined_call_operand.vmem [shape: f32[300,32], index: 2, kind: input, shape index: {}]
  %s3 = inlined_call_operand.vmem [shape: f32[500,32], index: 3, kind: input, shape index: {}]
  %s4 = inlined_call_operand.vmem [shape: f32[32,32], index: 4, kind: input, shape index: {}]
  %s5 = inlined_call_operand.vmem [shape: f32[32,32], index: 5, kind: input, shape index: {}]
  %s6 = inlined_call_operand.vmem [shape: f32[1,32], index: 6, kind: input, shape index: {}]
  %s7 = inlined_call_operand.vmem [shape: f32[32,16], index: 7, kind: input, shape index: {}]
  %s8 = inlined_call_operand.vmem [shape: f32[1,16], index: 8, kind: input, shape index: {}]
  %s9 = inlined_call_operand.vmem [shape: f32[16,8], index: 9, kind: input, shape index: {}]
  %s10 = inlined_call_operand.vmem [shape: f32[1,8], index: 10, kind: input, shape index: {}]
  %s11 = inlined_call_operand.vmem [shape: f32[8,8], index: 11, kind: input, shape index: {}]
  %s12 = inlined_call_operand.<no memory space> [shape: f32[1,1], index: 12, kind: input, shape index: {}]
  %s13 = inlined_call_operand.hbm [shape: f32[2,1,128], index: 13, kind: output, shape index: {}]
  %s14 = sld [smem:[#allocation0]]
  $region84: #{tpu_custom_call.1} parent=0
    _
  %s16 = ssub.s32 1, %s14
  %s17 = scalar_select 0, %s16, %s14
  %s18 = sshll.u32 %s0, 4
  %s19 = int_to_ptr.vmem [resolvable:$true] %s18
  %21 = dma.vmem_to_smem %s19, 32, [#allocation5], [#allocation4]
  %s22 = sshll.u32 %s1, 4
  %s23 = int_to_ptr.vmem [resolvable:$true] %s22
  %25 = dma.vmem_to_smem %s23, 32, [#allocation6], [#allocation4]
  %v26 = vstv %s12
  %27 = vst [vmem:[#allocation7] sm:$0x1] %v26
  %28 = dma.done [#allocation4], 64
  %29 = sfence
  $region1: #{tpu_custom_call.1} parent=0
    #allocation8 [shape = 'u8[1024]{0}', space=vmem, size = 0x400, scoped, tag = 'output window, operand 0']
    #allocation9 [shape = 's32[2]{0}', space=sflag, size = 0x8, scoped, tag = 'scoped memory for tpu_custom_call.1']
    %30 = vsyncpa [#allocation9], 0
    %s31 = scalar_lea.sflag [#allocation9], 1
    %32 = vsyncpa %s31, 0
    loop: start=0, step=1, limit=4
    $region2: #{tpu_custom_call.1} parent=1 // loop_pre_header
      _
    $region3: #{tpu_custom_call.1} parent=1 // loop_header
      %s34 = sphi 0, %s38
      %p35 = scmp.ge.s32.totalorder %s34, 4
      %s42 = sphi 0, %s42
      %s44 = sphi 0, %s42
      %s45 = sphi 0, %s44
      %s59 = sphi 0, %s45
      %s63 = sphi 0, %s63
      %s65 = sphi 0, %s63
      %s66 = sphi 0, %s65
      %s80 = sphi 0, %s66
      %s84 = sphi 0, %s84
      %s86 = sphi 0, %s84
      %s87 = sphi 0, %s86
      %s101 = sphi 0, %s87
      %s105 = sphi 0, %s105
      %s107 = sphi 0, %s105
      %s108 = sphi 0, %s107
      %s122 = sphi 0, %s108
      %s126 = sphi 0, %s126
      %s128 = sphi 0, %s126
      %s129 = sphi 0, %s128
      %s143 = sphi 0, %s129
      %s147 = sphi 0, %s147
      %s149 = sphi 0, %s147
      %s150 = sphi 0, %s149
      %s164 = sphi 0, %s150
      %s168 = sphi 0, %s168
      %s170 = sphi 0, %s168
      %s171 = sphi 0, %s170
      %s185 = sphi 0, %s171
      %s189 = sphi 0, %s189
      %s191 = sphi 0, %s189
      %s192 = sphi 0, %s191
      %s206 = sphi 0, %s192
      %s210 = sphi 0, %s210
      %s212 = sphi 0, %s210
      %s213 = sphi 0, %s212
      %s227 = sphi 0, %s213
      %s231 = sphi 0, %s231
      %s233 = sphi 0, %s231
      %s234 = sphi 0, %s233
      %s248 = sphi 0, %s234
      %s252 = sphi 0, %s252
      %s254 = sphi 0, %s252
      %s255 = sphi 0, %s254
      %s269 = sphi 0, %s255
      %s275 = sphi 0, %s277
      %s278 = sphi 0, %s275
      %s279 = sphi 0, %s278
      %s295 = sphi 0, %s279
    $region4: #{tpu_custom_call.1} parent=1 // loop_header_branch
      %37 = sbr.rel (%p35) target = $region8
    $region5: #{tpu_custom_call.1} parent=1 // loop_body
      %s39 = ssub.s32 %s34, 1
      %s40 = ssub.s32 %s34, 2
      %s41 = sadd.s32 %s34, 1
      %s43 = sadd.s32 %s42, 1
      %p46 = scmp.eq.s32.totalorder %s34, 1
      %p47 = scmp.ne.s32.totalorder %s42, %s44
      %p48 = scmp.eq.s32.totalorder %s34, 0
      %p49 = por %p47, %p48
      %p50 = scmp.ne.s32.totalorder %s42, %s44
      %p51 = scmp.eq.s32.totalorder %s39, 1
      %p52 = por %p50, %p51
      %p53 = scmp.ne.s32.totalorder %s44, %s45
      %p54 = scmp.eq.s32.totalorder %s39, 0
      %p55 = por %p53, %p54
      %p56 = scmp.ne.s32.totalorder %s44, %s45
      %p57 = scmp.eq.s32.totalorder %s40, 1
      %p58 = por %p56, %p57
      %p60 = scmp.ne.s32.totalorder %s45, %s59
      %p61 = scmp.eq.s32.totalorder %s40, 0
      %p62 = por %p60, %p61
      %s64 = sadd.s32 %s63, 1
      %p67 = scmp.eq.s32.totalorder %s34, 1
      %p68 = scmp.ne.s32.totalorder %s63, %s65
      %p69 = scmp.eq.s32.totalorder %s34, 0
      %p70 = por %p68, %p69
      %p71 = scmp.ne.s32.totalorder %s63, %s65
      %p72 = scmp.eq.s32.totalorder %s39, 1
      %p73 = por %p71, %p72
      %p74 = scmp.ne.s32.totalorder %s65, %s66
      %p75 = scmp.eq.s32.totalorder %s39, 0
      %p76 = por %p74, %p75
      %p77 = scmp.ne.s32.totalorder %s65, %s66
      %p78 = scmp.eq.s32.totalorder %s40, 1
      %p79 = por %p77, %p78
      %p81 = scmp.ne.s32.totalorder %s66, %s80
      %p82 = scmp.eq.s32.totalorder %s40, 0
      %p83 = por %p81, %p82
      %s85 = sadd.s32 %s84, 1
      %p88 = scmp.eq.s32.totalorder %s34, 1
      %p89 = scmp.ne.s32.totalorder %s84, %s86
      %p90 = scmp.eq.s32.totalorder %s34, 0
      %p91 = por %p89, %p90
      %p92 = scmp.ne.s32.totalorder %s84, %s86
      %p93 = scmp.eq.s32.totalorder %s39, 1
      %p94 = por %p92, %p93
      %p95 = scmp.ne.s32.totalorder %s86, %s87
      %p96 = scmp.eq.s32.totalorder %s39, 0
      %p97 = por %p95, %p96
      %p98 = scmp.ne.s32.totalorder %s86, %s87
      %p99 = scmp.eq.s32.totalorder %s40, 1
      %p100 = por %p98, %p99
      %p102 = scmp.ne.s32.totalorder %s87, %s101
      %p103 = scmp.eq.s32.totalorder %s40, 0
      %p104 = por %p102, %p103
      %s106 = sadd.s32 %s105, 1
      %p109 = scmp.eq.s32.totalorder %s34, 1
      %p110 = scmp.ne.s32.totalorder %s105, %s107
      %p111 = scmp.eq.s32.totalorder %s34, 0
      %p112 = por %p110, %p111
      %p113 = scmp.ne.s32.totalorder %s105, %s107
      %p114 = scmp.eq.s32.totalorder %s39, 1
      %p115 = por %p113, %p114
      %p116 = scmp.ne.s32.totalorder %s107, %s108
      %p117 = scmp.eq.s32.totalorder %s39, 0
      %p118 = por %p116, %p117
      %p119 = scmp.ne.s32.totalorder %s107, %s108
      %p120 = scmp.eq.s32.totalorder %s40, 1
      %p121 = por %p119, %p120
      %p123 = scmp.ne.s32.totalorder %s108, %s122
      %p124 = scmp.eq.s32.totalorder %s40, 0
      %p125 = por %p123, %p124
      %s127 = sadd.s32 %s126, 1
      %p130 = scmp.eq.s32.totalorder %s34, 1
      %p131 = scmp.ne.s32.totalorder %s126, %s128
      %p132 = scmp.eq.s32.totalorder %s34, 0
      %p133 = por %p131, %p132
      %p134 = scmp.ne.s32.totalorder %s126, %s128
      %p135 = scmp.eq.s32.totalorder %s39, 1
      %p136 = por %p134, %p135
      %p137 = scmp.ne.s32.totalorder %s128, %s129
      %p138 = scmp.eq.s32.totalorder %s39, 0
      %p139 = por %p137, %p138
      %p140 = scmp.ne.s32.totalorder %s128, %s129
      %p141 = scmp.eq.s32.totalorder %s40, 1
      %p142 = por %p140, %p141
      %p144 = scmp.ne.s32.totalorder %s129, %s143
      %p145 = scmp.eq.s32.totalorder %s40, 0
      %p146 = por %p144, %p145
      %s148 = sadd.s32 %s147, 1
      %p151 = scmp.eq.s32.totalorder %s34, 1
      %p152 = scmp.ne.s32.totalorder %s147, %s149
      %p153 = scmp.eq.s32.totalorder %s34, 0
      %p154 = por %p152, %p153
      %p155 = scmp.ne.s32.totalorder %s147, %s149
      %p156 = scmp.eq.s32.totalorder %s39, 1
      %p157 = por %p155, %p156
      %p158 = scmp.ne.s32.totalorder %s149, %s150
      %p159 = scmp.eq.s32.totalorder %s39, 0
      %p160 = por %p158, %p159
      %p161 = scmp.ne.s32.totalorder %s149, %s150
      %p162 = scmp.eq.s32.totalorder %s40, 1
      %p163 = por %p161, %p162
      %p165 = scmp.ne.s32.totalorder %s150, %s164
      %p166 = scmp.eq.s32.totalorder %s40, 0
      %p167 = por %p165, %p166
      %s169 = sadd.s32 %s168, 1
      %p172 = scmp.eq.s32.totalorder %s34, 1
      %p173 = scmp.ne.s32.totalorder %s168, %s170
      %p174 = scmp.eq.s32.totalorder %s34, 0
      %p175 = por %p173, %p174
      %p176 = scmp.ne.s32.totalorder %s168, %s170
      %p177 = scmp.eq.s32.totalorder %s39, 1
      %p178 = por %p176, %p177
      %p179 = scmp.ne.s32.totalorder %s170, %s171
      %p180 = scmp.eq.s32.totalorder %s39, 0
      %p181 = por %p179, %p180
      %p182 = scmp.ne.s32.totalorder %s170, %s171
      %p183 = scmp.eq.s32.totalorder %s40, 1
      %p184 = por %p182, %p183
      %p186 = scmp.ne.s32.totalorder %s171, %s185
      %p187 = scmp.eq.s32.totalorder %s40, 0
      %p188 = por %p186, %p187
      %s190 = sadd.s32 %s189, 1
      %p193 = scmp.eq.s32.totalorder %s34, 1
      %p194 = scmp.ne.s32.totalorder %s189, %s191
      %p195 = scmp.eq.s32.totalorder %s34, 0
      %p196 = por %p194, %p195
      %p197 = scmp.ne.s32.totalorder %s189, %s191
      %p198 = scmp.eq.s32.totalorder %s39, 1
      %p199 = por %p197, %p198
      %p200 = scmp.ne.s32.totalorder %s191, %s192
      %p201 = scmp.eq.s32.totalorder %s39, 0
      %p202 = por %p200, %p201
      %p203 = scmp.ne.s32.totalorder %s191, %s192
      %p204 = scmp.eq.s32.totalorder %s40, 1
      %p205 = por %p203, %p204
      %p207 = scmp.ne.s32.totalorder %s192, %s206
      %p208 = scmp.eq.s32.totalorder %s40, 0
      %p209 = por %p207, %p208
      %s211 = sadd.s32 %s210, 1
      %p214 = scmp.eq.s32.totalorder %s34, 1
      %p215 = scmp.ne.s32.totalorder %s210, %s212
      %p216 = scmp.eq.s32.totalorder %s34, 0
      %p217 = por %p215, %p216
      %p218 = scmp.ne.s32.totalorder %s210, %s212
      %p219 = scmp.eq.s32.totalorder %s39, 1
      %p220 = por %p218, %p219
      %p221 = scmp.ne.s32.totalorder %s212, %s213
      %p222 = scmp.eq.s32.totalorder %s39, 0
      %p223 = por %p221, %p222
      %p224 = scmp.ne.s32.totalorder %s212, %s213
      %p225 = scmp.eq.s32.totalorder %s40, 1
      %p226 = por %p224, %p225
      %p228 = scmp.ne.s32.totalorder %s213, %s227
      %p229 = scmp.eq.s32.totalorder %s40, 0
      %p230 = por %p228, %p229
      %s232 = sadd.s32 %s231, 1
      %p235 = scmp.eq.s32.totalorder %s34, 1
      %p236 = scmp.ne.s32.totalorder %s231, %s233
      %p237 = scmp.eq.s32.totalorder %s34, 0
      %p238 = por %p236, %p237
      %p239 = scmp.ne.s32.totalorder %s231, %s233
      %p240 = scmp.eq.s32.totalorder %s39, 1
      %p241 = por %p239, %p240
      %p242 = scmp.ne.s32.totalorder %s233, %s234
      %p243 = scmp.eq.s32.totalorder %s39, 0
      %p244 = por %p242, %p243
      %p245 = scmp.ne.s32.totalorder %s233, %s234
      %p246 = scmp.eq.s32.totalorder %s40, 1
      %p247 = por %p245, %p246
      %p249 = scmp.ne.s32.totalorder %s234, %s248
      %p250 = scmp.eq.s32.totalorder %s40, 0
      %p251 = por %p249, %p250
      %s253 = sadd.s32 %s252, 1
      %p256 = scmp.eq.s32.totalorder %s34, 1
      %p257 = scmp.ne.s32.totalorder %s252, %s254
      %p258 = scmp.eq.s32.totalorder %s34, 0
      %p259 = por %p257, %p258
      %p260 = scmp.ne.s32.totalorder %s252, %s254
      %p261 = scmp.eq.s32.totalorder %s39, 1
      %p262 = por %p260, %p261
      %p263 = scmp.ne.s32.totalorder %s254, %s255
      %p264 = scmp.eq.s32.totalorder %s39, 0
      %p265 = por %p263, %p264
      %p266 = scmp.ne.s32.totalorder %s254, %s255
      %p267 = scmp.eq.s32.totalorder %s40, 1
      %p268 = por %p266, %p267
      %p270 = scmp.ne.s32.totalorder %s255, %s269
      %p271 = scmp.eq.s32.totalorder %s40, 0
      %p272 = por %p270, %p271
      %s273 = ssub.s32 %s34, %s41
      %p274 = scmp.eq.s32.totalorder %s273, 0
      %s276 = sadd.s32 %s275, 1
      %s277 = scalar_select %p274, %s275, %s276
      %p280 = pneg %p274
      %p281 = scmp.eq.s32.totalorder %s34, 1
      %p282 = por %p280, %p281
      %p283 = scmp.ne.s32.totalorder %s275, %s278
      %p284 = scmp.eq.s32.totalorder %s34, 0
      %p285 = por %p283, %p284
      %p286 = scmp.ne.s32.totalorder %s275, %s278
      %p287 = scmp.eq.s32.totalorder %s39, 1
      %p288 = por %p286, %p287
      %p289 = scmp.ne.s32.totalorder %s278, %s279
      %p290 = scmp.eq.s32.totalorder %s39, 0
      %p291 = por %p289, %p290
      %p292 = scmp.ne.s32.totalorder %s278, %s279
      %p293 = scmp.eq.s32.totalorder %s40, 1
      %p294 = por %p292, %p293
      %p296 = scmp.ne.s32.totalorder %s279, %s295
      %p297 = scmp.eq.s32.totalorder %s40, 0
      %p298 = por %p296, %p297
      %p299 = scmp.le.s32.totalorder 1, %s34
      %p300 = scmp.lt.s32.totalorder %s34, 3
      %p301 = pnand %p299, %p300
      %p302 = pneg %p301
      // Predicated region
      $region9: #{tpu_custom_call.1} parent=5 // pred_check
        _
      $region10: #{tpu_custom_call.1} parent=5 // pred_check_branch
        %304 = sbr.rel (%p301) target = $region12
      $region11: #{tpu_custom_call.1} parent=5 // pred_region
        %s305 = ssub.s32 %s34, 1
        // Predicated region
        $region13: #{tpu_custom_call.1} parent=11 // pred_check
          %p306 = pneg %p55
        $region14: #{tpu_custom_call.1} parent=11 // pred_check_branch
          %308 = sbr.rel (%p306) target = $region16
        $region15: #{tpu_custom_call.1} parent=11 // pred_region
          _
        $region16: #{tpu_custom_call.1} parent=11 // pred_fallthru
          _
        // Predicated region
        $region17: #{tpu_custom_call.1} parent=11 // pred_check
          %p309 = pneg %p76
        $region18: #{tpu_custom_call.1} parent=11 // pred_check_branch
          %311 = sbr.rel (%p309) target = $region20
        $region19: #{tpu_custom_call.1} parent=11 // pred_region
          _
        $region20: #{tpu_custom_call.1} parent=11 // pred_fallthru
          _
        // Predicated region
        $region21: #{tpu_custom_call.1} parent=11 // pred_check
          %p312 = pneg %p97
        $region22: #{tpu_custom_call.1} parent=11 // pred_check_branch
          %314 = sbr.rel (%p312) target = $region24
        $region23: #{tpu_custom_call.1} parent=11 // pred_region
          _
        $region24: #{tpu_custom_call.1} parent=11 // pred_fallthru
          _
        // Predicated region
        $region25: #{tpu_custom_call.1} parent=11 // pred_check
          %p315 = pneg %p118
        $region26: #{tpu_custom_call.1} parent=11 // pred_check_branch
          %317 = sbr.rel (%p315) target = $region28
        $region27: #{tpu_custom_call.1} parent=11 // pred_region
          _
        $region28: #{tpu_custom_call.1} parent=11 // pred_fallthru
          _
        // Predicated region
        $region29: #{tpu_custom_call.1} parent=11 // pred_check
          %p318 = pneg %p139
        $region30: #{tpu_custom_call.1} parent=11 // pred_check_branch
          %320 = sbr.rel (%p318) target = $region32
        $region31: #{tpu_custom_call.1} parent=11 // pred_region
          _
        $region32: #{tpu_custom_call.1} parent=11 // pred_fallthru
          _
        // Predicated region
        $region33: #{tpu_custom_call.1} parent=11 // pred_check
          %p321 = pneg %p160
        $region34: #{tpu_custom_call.1} parent=11 // pred_check_branch
          %323 = sbr.rel (%p321) target = $region36
        $region35: #{tpu_custom_call.1} parent=11 // pred_region
          _
        $region36: #{tpu_custom_call.1} parent=11 // pred_fallthru
          _
        // Predicated region
        $region37: #{tpu_custom_call.1} parent=11 // pred_check
          %p324 = pneg %p181
        $region38: #{tpu_custom_call.1} parent=11 // pred_check_branch
          %326 = sbr.rel (%p324) target = $region40
        $region39: #{tpu_custom_call.1} parent=11 // pred_region
          _
        $region40: #{tpu_custom_call.1} parent=11 // pred_fallthru
          _
        // Predicated region
        $region41: #{tpu_custom_call.1} parent=11 // pred_check
          %p327 = pneg %p202
        $region42: #{tpu_custom_call.1} parent=11 // pred_check_branch
          %329 = sbr.rel (%p327) target = $region44
        $region43: #{tpu_custom_call.1} parent=11 // pred_region
          _
        $region44: #{tpu_custom_call.1} parent=11 // pred_fallthru
          _
        // Predicated region
        $region45: #{tpu_custom_call.1} parent=11 // pred_check
          %p330 = pneg %p223
        $region46: #{tpu_custom_call.1} parent=11 // pred_check_branch
          %332 = sbr.rel (%p330) target = $region48
        $region47: #{tpu_custom_call.1} parent=11 // pred_region
          _
        $region48: #{tpu_custom_call.1} parent=11 // pred_fallthru
          _
        // Predicated region
        $region49: #{tpu_custom_call.1} parent=11 // pred_check
          %p333 = pneg %p244
        $region50: #{tpu_custom_call.1} parent=11 // pred_check_branch
          %335 = sbr.rel (%p333) target = $region52
        $region51: #{tpu_custom_call.1} parent=11 // pred_region
          _
        $region52: #{tpu_custom_call.1} parent=11 // pred_fallthru
          _
        // Predicated region
        $region53: #{tpu_custom_call.1} parent=11 // pred_check
          %p336 = pneg %p265
        $region54: #{tpu_custom_call.1} parent=11 // pred_check_branch
          %338 = sbr.rel (%p336) target = $region56
        $region55: #{tpu_custom_call.1} parent=11 // pred_region
          _
        $region56: #{tpu_custom_call.1} parent=11 // pred_fallthru
          _
      $region12: #{tpu_custom_call.1} parent=5 // pred_fallthru
        _
      %p339 = scmp.lt.s32.totalorder %s34, 2
      // Predicated region
      $region57: #{tpu_custom_call.1} parent=5 // pred_check
        %p340 = pneg %p339
      $region58: #{tpu_custom_call.1} parent=5 // pred_check_branch
        %342 = sbr.rel (%p340) target = $region60
      $region59: #{tpu_custom_call.1} parent=5 // pred_region
        _
      $region60: #{tpu_custom_call.1} parent=5 // pred_fallthru
        _
      %p343 = scmp.le.s32.totalorder 1, %s34
      %p344 = scmp.lt.s32.totalorder %s34, 3
      %p345 = pnand %p343, %p344
      %p346 = pneg %p345
      // Predicated region
      $region61: #{tpu_custom_call.1} parent=5 // pred_check
        _
      $region62: #{tpu_custom_call.1} parent=5 // pred_check_branch
        %348 = sbr.rel (%p345) target = $region64
      $region63: #{tpu_custom_call.1} parent=5 // pred_region
        %s349 = ssub.s32 %s34, 1
        %p350 = pneg %p55
        %p351 = pneg %p52
        %p352 = pneg %p76
        %p353 = pneg %p73
        %p354 = pneg %p97
        %p355 = pneg %p94
        %p356 = pneg %p118
        %p357 = pneg %p115
        %p358 = pneg %p139
        %p359 = pneg %p136
        %p360 = pneg %p160
        %p361 = pneg %p157
        %p362 = pneg %p181
        %p363 = pneg %p178
        %p364 = pneg %p202
        %p365 = pneg %p199
        %p366 = pneg %p223
        %p367 = pneg %p220
        %p368 = pneg %p244
        %p369 = pneg %p241
        %p370 = pneg %p265
        %p371 = pneg %p262
        %p372 = pneg %p291
        %p373 = pneg %p288
        %s374 = sand.u32 %s278, 1
        %s375 = scalar_lea.sflag [#allocation9], %s374
        %s376 = sand.u32 %s278, 1
        %s377 = scalar_lea.vmem [#allocation8], %s376
        %s378 = smul.u32 %s39, 128
        loop: start=0, step=1, limit=16
        $region65: #{tpu_custom_call.1} parent=63 // loop_pre_header
          _
        $region66: #{tpu_custom_call.1} parent=63 // loop_header
          %s380 = sphi 0, %s384
          %p381 = scmp.ge.s32.totalorder %s380, 16
        $region67: #{tpu_custom_call.1} parent=63 // loop_header_branch
          %383 = sbr.rel (%p381) target = $region71
        $region68: #{tpu_custom_call.1} parent=63 // loop_body
          %s385 = smul.u32 %s380, 8
          %s386 = sadd.s32 %s378, %s385
          %s387 = sld [smem:[#allocation5 + %s386]]
          %s388 = scalar_lea.vmem %s2, %s387
          %v389 = vld [vmem:[%s388] sm:$0x1]
          %s390 = scalar_lea.vmem [#allocation2], %s385
          %vm391 = vcmask 253952
          %392 = vst.msk [vmem:[%s390] sm:$0x1] %vm391, %v389
          %s393 = sld [smem:[#allocation6 + %s386]]
          %s394 = scalar_lea.vmem %s3, %s393
          %v395 = vld [vmem:[%s394] sm:$0x1]
          %s396 = scalar_lea.vmem [#allocation3], %s385
          %397 = vst.msk [vmem:[%s396] sm:$0x1] %vm391, %v395
          %s398 = sadd.s32 %s385, 1
          %s399 = sadd.s32 %s378, %s398
          %s400 = sld [smem:[#allocation5 + %s399]]
          %s401 = scalar_lea.vmem %s2, %s400
          %v402 = vld [vmem:[%s401] sm:$0x1]
          %s403 = scalar_lea.vmem [#allocation2], %s398
          %404 = vst.msk [vmem:[%s403] sm:$0x1] %vm391, %v402
          %s405 = sld [smem:[#allocation6 + %s399]]
          %s406 = scalar_lea.vmem %s3, %s405
          %v407 = vld [vmem:[%s406] sm:$0x1]
          %s408 = scalar_lea.vmem [#allocation3], %s398
          %409 = vst.msk [vmem:[%s408] sm:$0x1] %vm391, %v407
          %s410 = sadd.s32 %s385, 2
          %s411 = sadd.s32 %s378, %s410
          %s412 = sld [smem:[#allocation5 + %s411]]
          %s413 = scalar_lea.vmem %s2, %s412
          %v414 = vld [vmem:[%s413] sm:$0x1]
          %s415 = scalar_lea.vmem [#allocation2], %s410
          %416 = vst.msk [vmem:[%s415] sm:$0x1] %vm391, %v414
          %s417 = sld [smem:[#allocation6 + %s411]]
          %s418 = scalar_lea.vmem %s3, %s417
          %v419 = vld [vmem:[%s418] sm:$0x1]
          %s420 = scalar_lea.vmem [#allocation3], %s410
          %421 = vst.msk [vmem:[%s420] sm:$0x1] %vm391, %v419
          %s422 = sadd.s32 %s385, 3
          %s423 = sadd.s32 %s378, %s422
          %s424 = sld [smem:[#allocation5 + %s423]]
          %s425 = scalar_lea.vmem %s2, %s424
          %v426 = vld [vmem:[%s425] sm:$0x1]
          %s427 = scalar_lea.vmem [#allocation2], %s422
          %428 = vst.msk [vmem:[%s427] sm:$0x1] %vm391, %v426
          %s429 = sld [smem:[#allocation6 + %s423]]
          %s430 = scalar_lea.vmem %s3, %s429
          %v431 = vld [vmem:[%s430] sm:$0x1]
          %s432 = scalar_lea.vmem [#allocation3], %s422
          %433 = vst.msk [vmem:[%s432] sm:$0x1] %vm391, %v431
          %s434 = sadd.s32 %s385, 4
          %s435 = sadd.s32 %s378, %s434
          %s436 = sld [smem:[#allocation5 + %s435]]
          %s437 = scalar_lea.vmem %s2, %s436
          %v438 = vld [vmem:[%s437] sm:$0x1]
          %s439 = scalar_lea.vmem [#allocation2], %s434
          %440 = vst.msk [vmem:[%s439] sm:$0x1] %vm391, %v438
          %s441 = sld [smem:[#allocation6 + %s435]]
          %s442 = scalar_lea.vmem %s3, %s441
          %v443 = vld [vmem:[%s442] sm:$0x1]
          %s444 = scalar_lea.vmem [#allocation3], %s434
          %445 = vst.msk [vmem:[%s444] sm:$0x1] %vm391, %v443
          %s446 = sadd.s32 %s385, 5
          %s447 = sadd.s32 %s378, %s446
          %s448 = sld [smem:[#allocation5 + %s447]]
          %s449 = scalar_lea.vmem %s2, %s448
          %v450 = vld [vmem:[%s449] sm:$0x1]
          %s451 = scalar_lea.vmem [#allocation2], %s446
          %452 = vst.msk [vmem:[%s451] sm:$0x1] %vm391, %v450
          %s453 = sld [smem:[#allocation6 + %s447]]
          %s454 = scalar_lea.vmem %s3, %s453
          %v455 = vld [vmem:[%s454] sm:$0x1]
          %s456 = scalar_lea.vmem [#allocation3], %s446
          %457 = vst.msk [vmem:[%s456] sm:$0x1] %vm391, %v455
          %s458 = sadd.s32 %s385, 6
          %s459 = sadd.s32 %s378, %s458
          %s460 = sld [smem:[#allocation5 + %s459]]
          %s461 = scalar_lea.vmem %s2, %s460
          %v462 = vld [vmem:[%s461] sm:$0x1]
          %s463 = scalar_lea.vmem [#allocation2], %s458
          %464 = vst.msk [vmem:[%s463] sm:$0x1] %vm391, %v462
          %s465 = sld [smem:[#allocation6 + %s459]]
          %s466 = scalar_lea.vmem %s3, %s465
          %v467 = vld [vmem:[%s466] sm:$0x1]
          %s468 = scalar_lea.vmem [#allocation3], %s458
          %469 = vst.msk [vmem:[%s468] sm:$0x1] %vm391, %v467
          %s470 = sadd.s32 %s385, 7
          %s471 = sadd.s32 %s378, %s470
          %s472 = sld [smem:[#allocation5 + %s471]]
          %s473 = scalar_lea.vmem %s2, %s472
          %v474 = vld [vmem:[%s473] sm:$0x1]
          %s475 = scalar_lea.vmem [#allocation2], %s470
          %476 = vst.msk [vmem:[%s475] sm:$0x1] %vm391, %v474
          %s477 = sld [smem:[#allocation6 + %s471]]
          %s478 = scalar_lea.vmem %s3, %s477
          %v479 = vld [vmem:[%s478] sm:$0x1]
          %s480 = scalar_lea.vmem [#allocation3], %s470
          %481 = vst.msk [vmem:[%s480] sm:$0x1] %vm391, %v479
        $region69: #{tpu_custom_call.1} parent=63 // loop_footer
          %s384 = sadd.s32 1, %s380
        $region70: #{tpu_custom_call.1} parent=63 // loop_footer_branch
          %379 = sbr.rel target = $region66
        $region71: #{tpu_custom_call.1} parent=63 // loop_exit
          _
        %v482 = vld [vmem:[#allocation2] sm:$0xff]
        %v483 = vld [vmem:[#allocation2 + $0x8] sm:$0xff]
        %v484 = vld [vmem:[#allocation2 + $0x10] sm:$0xff]
        %v485 = vld [vmem:[#allocation2 + $0x18] sm:$0xff]
        %v486 = vld [vmem:[#allocation2 + $0x20] sm:$0xff]
        %v487 = vld [vmem:[#allocation2 + $0x28] sm:$0xff]
        %v488 = vld [vmem:[#allocation2 + $0x30] sm:$0xff]
        %v489 = vld [vmem:[#allocation2 + $0x38] sm:$0xff]
        %v490 = vld [vmem:[#allocation2 + $0x40] sm:$0xff]
        %v491 = vld [vmem:[#allocation2 + $0x48] sm:$0xff]
        %v492 = vld [vmem:[#allocation2 + $0x50] sm:$0xff]
        %v493 = vld [vmem:[#allocation2 + $0x58] sm:$0xff]
        %v494 = vld [vmem:[#allocation2 + $0x60] sm:$0xff]
        %v495 = vld [vmem:[#allocation2 + $0x68] sm:$0xff]
        %v496 = vld [vmem:[#allocation2 + $0x70] sm:$0xff]
        %v497 = vld [vmem:[#allocation2 + $0x78] sm:$0xff]
        %v498 = vld [vmem:[#allocation3] sm:$0xff]
        %v499 = vld [vmem:[#allocation3 + $0x8] sm:$0xff]
        %v500 = vld [vmem:[#allocation3 + $0x10] sm:$0xff]
        %v501 = vld [vmem:[#allocation3 + $0x18] sm:$0xff]
        %v502 = vld [vmem:[#allocation3 + $0x20] sm:$0xff]
        %v503 = vld [vmem:[#allocation3 + $0x28] sm:$0xff]
        %v504 = vld [vmem:[#allocation3 + $0x30] sm:$0xff]
        %v505 = vld [vmem:[#allocation3 + $0x38] sm:$0xff]
        %v506 = vld [vmem:[#allocation3 + $0x40] sm:$0xff]
        %v507 = vld [vmem:[#allocation3 + $0x48] sm:$0xff]
        %v508 = vld [vmem:[#allocation3 + $0x50] sm:$0xff]
        %v509 = vld [vmem:[#allocation3 + $0x58] sm:$0xff]
        %v510 = vld [vmem:[#allocation3 + $0x60] sm:$0xff]
        %v511 = vld [vmem:[#allocation3 + $0x68] sm:$0xff]
        %v512 = vld [vmem:[#allocation3 + $0x70] sm:$0xff]
        %v513 = vld [vmem:[#allocation3 + $0x78] sm:$0xff]
        %v514 = vld [vmem:[%s4] sm:$0xff]
        %v515 = vld [vmem:[%s4 + $0x8] sm:$0xff]
        %v516 = vld [vmem:[%s4 + $0x10] sm:$0xff]
        %v517 = vld [vmem:[%s4 + $0x18] sm:$0xff]
        %v518 = vld [vmem:[%s5] sm:$0xff]
        %v519 = vld [vmem:[%s5 + $0x8] sm:$0xff]
        %v520 = vld [vmem:[%s5 + $0x10] sm:$0xff]
        %v521 = vld [vmem:[%s5 + $0x18] sm:$0xff]
        %vm522 = vcmask 261120
        %v524 = vsel %vm522, %v498, 0
        %v527 = vsel %vm522, %v499, 0
        %v530 = vsel %vm522, %v500, 0
        %v533 = vsel %vm522, %v501, 0
        %v536 = vsel %vm522, %v502, 0
        %v539 = vsel %vm522, %v503, 0
        %v542 = vsel %vm522, %v504, 0
        %v545 = vsel %vm522, %v505, 0
        %v548 = vsel %vm522, %v506, 0
        %v551 = vsel %vm522, %v507, 0
        %v554 = vsel %vm522, %v508, 0
        %v557 = vsel %vm522, %v509, 0
        %v560 = vsel %vm522, %v510, 0
        %v563 = vsel %vm522, %v511, 0
        %v566 = vsel %vm522, %v512, 0
        %v569 = vsel %vm522, %v513, 0
        %571 = vmatprep.subr.mxu0 0.0
        %572 = vmatpush1.msra.mxu0 0.0
        %573 = vmatprep.subr.mxu0 0.0
        %574 = vmatpush1.msra.mxu0 0.0
        %575 = vmatprep.subr.mxu0 0.0
        %576 = vmatpush1.msra.mxu0 0.0
        %577 = vmatprep.subr.mxu0 0.0
        %578 = vmatpush1.msra.mxu0 0.0
        %579 = vmatprep.subr.mxu0 0.0
        %580 = vmatpush1.msra.mxu0 0.0
        %581 = vmatprep.subr.mxu0 0.0
        %582 = vmatpush1.msra.mxu0 0.0
        %583 = vmatprep.subr.mxu0 0.0
        %584 = vmatpush1.msra.mxu0 0.0
        %585 = vmatprep.subr.mxu0 0.0
        %586 = vmatpush1.msra.mxu0 0.0
        %587 = vmatprep.subr.mxu0 0.0
        %588 = vmatpush1.msra.mxu0 0.0
        %589 = vmatprep.subr.mxu0 0.0
        %590 = vmatpush1.msra.mxu0 0.0
        %591 = vmatprep.subr.mxu0 0.0
        %592 = vmatpush1.msra.mxu0 0.0
        %593 = vmatprep.subr.mxu0 0.0
        %594 = vmatpush1.msra.mxu0 0.0
        %595 = vmatprep.subr.mxu0 0.0
        %596 = vmatpush1.msra.mxu0 %v521
        %597 = vmatprep.subr.mxu0 0.0
        %598 = vmatpush1.msra.mxu0 %v520
        %599 = vmatprep.subr.mxu0 0.0
        %600 = vmatpush1.msra.mxu0 %v519
        %601 = vmatprep.subr.mxu0 0.0
        %602 = vmatpush1.msra.mxu0 %v518
        %603 = vmatprep.subr.mxu0 0.0
        %604 = vmatpush2.msra.mxu0 0.0
        %605 = vmatprep.subr.mxu0 0.0
        %606 = vmatpush2.msra.mxu0 0.0
        %607 = vmatprep.subr.mxu0 0.0
        %608 = vmatpush2.msra.mxu0 0.0
        %609 = vmatprep.subr.mxu0 0.0
        %610 = vmatpush2.msra.mxu0 0.0
        %611 = vmatprep.subr.mxu0 0.0
        %612 = vmatpush2.msra.mxu0 0.0
        %613 = vmatprep.subr.mxu0 0.0
        %614 = vmatpush2.msra.mxu0 0.0
        %615 = vmatprep.subr.mxu0 0.0
        %616 = vmatpush2.msra.mxu0 0.0
        %617 = vmatprep.subr.mxu0 0.0
        %618 = vmatpush2.msra.mxu0 0.0
        %619 = vmatprep.subr.mxu0 0.0
        %620 = vmatpush2.msra.mxu0 0.0
        %621 = vmatprep.subr.mxu0 0.0
        %622 = vmatpush2.msra.mxu0 0.0
        %623 = vmatprep.subr.mxu0 0.0
        %624 = vmatpush2.msra.mxu0 0.0
        %625 = vmatprep.subr.mxu0 0.0
        %626 = vmatpush2.msra.mxu0 0.0
        %627 = vmatprep.subr.mxu0 0.0
        %628 = vmatpush2.msra.mxu0 0.0
        %629 = vmatprep.subr.mxu0 0.0
        %630 = vmatpush2.msra.mxu0 0.0
        %631 = vmatprep.subr.mxu0 0.0
        %632 = vmatpush2.msra.mxu0 0.0
        %633 = vmatprep.subr.mxu0 0.0
        %634 = vmatpush2.msra.mxu0 0.0
        %635 = vmatprep.mubr.f32.mxu0 0.0
        %636 = vmatmul.mubr.f32.gmra.mxu0 %v524
        %v637 = vpop.f32.mrf.mxu0
        %v638 = vadd.f32 0.0, %v637
        %v639 = vpop.f32.mrf.mxu0
        %640 = vmatprep.mubr.f32.mxu0 0.0
        %641 = vmatmul.mubr.f32.gmra.mxu0 %v527
        %v642 = vpop.f32.mrf.mxu0
        %v643 = vadd.f32 0.0, %v642
        %v644 = vpop.f32.mrf.mxu0
        %645 = vmatprep.mubr.f32.mxu0 0.0
        %646 = vmatmul.mubr.f32.gmra.mxu0 %v530
        %v647 = vpop.f32.mrf.mxu0
        %v648 = vadd.f32 0.0, %v647
        %v649 = vpop.f32.mrf.mxu0
        %650 = vmatprep.mubr.f32.mxu0 0.0
        %651 = vmatmul.mubr.f32.gmra.mxu0 %v533
        %v652 = vpop.f32.mrf.mxu0
        %v653 = vadd.f32 0.0, %v652
        %v654 = vpop.f32.mrf.mxu0
        %655 = vmatprep.mubr.f32.mxu0 0.0
        %656 = vmatmul.mubr.f32.gmra.mxu0 %v536
        %v657 = vpop.f32.mrf.mxu0
        %v658 = vadd.f32 0.0, %v657
        %v659 = vpop.f32.mrf.mxu0
        %660 = vmatprep.mubr.f32.mxu0 0.0
        %661 = vmatmul.mubr.f32.gmra.mxu0 %v539
        %v662 = vpop.f32.mrf.mxu0
        %v663 = vadd.f32 0.0, %v662
        %v664 = vpop.f32.mrf.mxu0
        %665 = vmatprep.mubr.f32.mxu0 0.0
        %666 = vmatmul.mubr.f32.gmra.mxu0 %v542
        %v667 = vpop.f32.mrf.mxu0
        %v668 = vadd.f32 0.0, %v667
        %v669 = vpop.f32.mrf.mxu0
        %670 = vmatprep.mubr.f32.mxu0 0.0
        %671 = vmatmul.mubr.f32.gmra.mxu0 %v545
        %v672 = vpop.f32.mrf.mxu0
        %v673 = vadd.f32 0.0, %v672
        %v674 = vpop.f32.mrf.mxu0
        %675 = vmatprep.mubr.f32.mxu0 0.0
        %676 = vmatmul.mubr.f32.gmra.mxu0 %v548
        %v677 = vpop.f32.mrf.mxu0
        %v678 = vadd.f32 0.0, %v677
        %v679 = vpop.f32.mrf.mxu0
        %680 = vmatprep.mubr.f32.mxu0 0.0
        %681 = vmatmul.mubr.f32.gmra.mxu0 %v551
        %v682 = vpop.f32.mrf.mxu0
        %v683 = vadd.f32 0.0, %v682
        %v684 = vpop.f32.mrf.mxu0
        %685 = vmatprep.mubr.f32.mxu0 0.0
        %686 = vmatmul.mubr.f32.gmra.mxu0 %v554
        %v687 = vpop.f32.mrf.mxu0
        %v688 = vadd.f32 0.0, %v687
        %v689 = vpop.f32.mrf.mxu0
        %690 = vmatprep.mubr.f32.mxu0 0.0
        %691 = vmatmul.mubr.f32.gmra.mxu0 %v557
        %v692 = vpop.f32.mrf.mxu0
        %v693 = vadd.f32 0.0, %v692
        %v694 = vpop.f32.mrf.mxu0
        %695 = vmatprep.mubr.f32.mxu0 0.0
        %696 = vmatmul.mubr.f32.gmra.mxu0 %v560
        %v697 = vpop.f32.mrf.mxu0
        %v698 = vadd.f32 0.0, %v697
        %v699 = vpop.f32.mrf.mxu0
        %700 = vmatprep.mubr.f32.mxu0 0.0
        %701 = vmatmul.mubr.f32.gmra.mxu0 %v563
        %v702 = vpop.f32.mrf.mxu0
        %v703 = vadd.f32 0.0, %v702
        %v704 = vpop.f32.mrf.mxu0
        %705 = vmatprep.mubr.f32.mxu0 0.0
        %706 = vmatmul.mubr.f32.gmra.mxu0 %v566
        %v707 = vpop.f32.mrf.mxu0
        %v708 = vadd.f32 0.0, %v707
        %v709 = vpop.f32.mrf.mxu0
        %710 = vmatprep.mubr.f32.mxu0 0.0
        %711 = vmatmul.mubr.f32.gmra.mxu0 %v569
        %v712 = vpop.f32.mrf.mxu0
        %v713 = vadd.f32 0.0, %v712
        %v714 = vpop.f32.mrf.mxu0
        %715 = vdwg.mxu0
        %v717 = vsel %vm522, %v482, 0
        %v720 = vsel %vm522, %v483, 0
        %v723 = vsel %vm522, %v484, 0
        %v726 = vsel %vm522, %v485, 0
        %v729 = vsel %vm522, %v486, 0
        %v732 = vsel %vm522, %v487, 0
        %v735 = vsel %vm522, %v488, 0
        %v738 = vsel %vm522, %v489, 0
        %v741 = vsel %vm522, %v490, 0
        %v744 = vsel %vm522, %v491, 0
        %v747 = vsel %vm522, %v492, 0
        %v750 = vsel %vm522, %v493, 0
        %v753 = vsel %vm522, %v494, 0
        %v756 = vsel %vm522, %v495, 0
        %v759 = vsel %vm522, %v496, 0
        %v762 = vsel %vm522, %v497, 0
        %764 = vmatprep.subr.mxu0 0.0
        %765 = vmatpush1.msra.mxu0 0.0
        %766 = vmatprep.subr.mxu0 0.0
        %767 = vmatpush1.msra.mxu0 0.0
        %768 = vmatprep.subr.mxu0 0.0
        %769 = vmatpush1.msra.mxu0 0.0
        %770 = vmatprep.subr.mxu0 0.0
        %771 = vmatpush1.msra.mxu0 0.0
        %772 = vmatprep.subr.mxu0 0.0
        %773 = vmatpush1.msra.mxu0 0.0
        %774 = vmatprep.subr.mxu0 0.0
        %775 = vmatpush1.msra.mxu0 0.0
        %776 = vmatprep.subr.mxu0 0.0
        %777 = vmatpush1.msra.mxu0 0.0
        %778 = vmatprep.subr.mxu0 0.0
        %779 = vmatpush1.msra.mxu0 0.0
        %780 = vmatprep.subr.mxu0 0.0
        %781 = vmatpush1.msra.mxu0 0.0
        %782 = vmatprep.subr.mxu0 0.0
        %783 = vmatpush1.msra.mxu0 0.0
        %784 = vmatprep.subr.mxu0 0.0
        %785 = vmatpush1.msra.mxu0 0.0
        %786 = vmatprep.subr.mxu0 0.0
        %787 = vmatpush1.msra.mxu0 0.0
        %788 = vmatprep.subr.mxu0 0.0
        %789 = vmatpush1.msra.mxu0 %v517
        %790 = vmatprep.subr.mxu0 0.0
        %791 = vmatpush1.msra.mxu0 %v516
        %792 = vmatprep.subr.mxu0 0.0
        %793 = vmatpush1.msra.mxu0 %v515
        %794 = vmatprep.subr.mxu0 0.0
        %795 = vmatpush1.msra.mxu0 %v514
        %796 = vmatprep.subr.mxu0 0.0
        %797 = vmatpush2.msra.mxu0 0.0
        %798 = vmatprep.subr.mxu0 0.0
        %799 = vmatpush2.msra.mxu0 0.0
        %800 = vmatprep.subr.mxu0 0.0
        %801 = vmatpush2.msra.mxu0 0.0
        %802 = vmatprep.subr.mxu0 0.0
        %803 = vmatpush2.msra.mxu0 0.0
        %804 = vmatprep.subr.mxu0 0.0
        %805 = vmatpush2.msra.mxu0 0.0
        %806 = vmatprep.subr.mxu0 0.0
        %807 = vmatpush2.msra.mxu0 0.0
        %808 = vmatprep.subr.mxu0 0.0
        %809 = vmatpush2.msra.mxu0 0.0
        %810 = vmatprep.subr.mxu0 0.0
        %811 = vmatpush2.msra.mxu0 0.0
        %812 = vmatprep.subr.mxu0 0.0
        %813 = vmatpush2.msra.mxu0 0.0
        %814 = vmatprep.subr.mxu0 0.0
        %815 = vmatpush2.msra.mxu0 0.0
        %816 = vmatprep.subr.mxu0 0.0
        %817 = vmatpush2.msra.mxu0 0.0
        %818 = vmatprep.subr.mxu0 0.0
        %819 = vmatpush2.msra.mxu0 0.0
        %820 = vmatprep.subr.mxu0 0.0
        %821 = vmatpush2.msra.mxu0 0.0
        %822 = vmatprep.subr.mxu0 0.0
        %823 = vmatpush2.msra.mxu0 0.0
        %824 = vmatprep.subr.mxu0 0.0
        %825 = vmatpush2.msra.mxu0 0.0
        %826 = vmatprep.subr.mxu0 0.0
        %827 = vmatpush2.msra.mxu0 0.0
        %828 = vmatprep.mubr.f32.mxu0 0.0
        %829 = vmatmul.mubr.f32.gmra.mxu0 %v717
        %v830 = vpop.f32.mrf.mxu0
        %v831 = vadd.f32 %v638, %v830
        %v832 = vpop.f32.mrf.mxu0
        %833 = vmatprep.mubr.f32.mxu0 0.0
        %834 = vmatmul.mubr.f32.gmra.mxu0 %v720
        %v835 = vpop.f32.mrf.mxu0
        %v836 = vadd.f32 %v643, %v835
        %v837 = vpop.f32.mrf.mxu0
        %838 = vmatprep.mubr.f32.mxu0 0.0
        %839 = vmatmul.mubr.f32.gmra.mxu0 %v723
        %v840 = vpop.f32.mrf.mxu0
        %v841 = vadd.f32 %v648, %v840
        %v842 = vpop.f32.mrf.mxu0
        %843 = vmatprep.mubr.f32.mxu0 0.0
        %844 = vmatmul.mubr.f32.gmra.mxu0 %v726
        %v845 = vpop.f32.mrf.mxu0
        %v846 = vadd.f32 %v653, %v845
        %v847 = vpop.f32.mrf.mxu0
        %848 = vmatprep.mubr.f32.mxu0 0.0
        %849 = vmatmul.mubr.f32.gmra.mxu0 %v729
        %v850 = vpop.f32.mrf.mxu0
        %v851 = vadd.f32 %v658, %v850
        %v852 = vpop.f32.mrf.mxu0
        %853 = vmatprep.mubr.f32.mxu0 0.0
        %854 = vmatmul.mubr.f32.gmra.mxu0 %v732
        %v855 = vpop.f32.mrf.mxu0
        %v856 = vadd.f32 %v663, %v855
        %v857 = vpop.f32.mrf.mxu0
        %858 = vmatprep.mubr.f32.mxu0 0.0
        %859 = vmatmul.mubr.f32.gmra.mxu0 %v735
        %v860 = vpop.f32.mrf.mxu0
        %v861 = vadd.f32 %v668, %v860
        %v862 = vpop.f32.mrf.mxu0
        %863 = vmatprep.mubr.f32.mxu0 0.0
        %864 = vmatmul.mubr.f32.gmra.mxu0 %v738
        %v865 = vpop.f32.mrf.mxu0
        %v866 = vadd.f32 %v673, %v865
        %v867 = vpop.f32.mrf.mxu0
        %868 = vmatprep.mubr.f32.mxu0 0.0
        %869 = vmatmul.mubr.f32.gmra.mxu0 %v741
        %v870 = vpop.f32.mrf.mxu0
        %v871 = vadd.f32 %v678, %v870
        %v872 = vpop.f32.mrf.mxu0
        %873 = vmatprep.mubr.f32.mxu0 0.0
        %874 = vmatmul.mubr.f32.gmra.mxu0 %v744
        %v875 = vpop.f32.mrf.mxu0
        %v876 = vadd.f32 %v683, %v875
        %v877 = vpop.f32.mrf.mxu0
        %878 = vmatprep.mubr.f32.mxu0 0.0
        %879 = vmatmul.mubr.f32.gmra.mxu0 %v747
        %v880 = vpop.f32.mrf.mxu0
        %v881 = vadd.f32 %v688, %v880
        %v882 = vpop.f32.mrf.mxu0
        %883 = vmatprep.mubr.f32.mxu0 0.0
        %884 = vmatmul.mubr.f32.gmra.mxu0 %v750
        %v885 = vpop.f32.mrf.mxu0
        %v886 = vadd.f32 %v693, %v885
        %v887 = vpop.f32.mrf.mxu0
        %888 = vmatprep.mubr.f32.mxu0 0.0
        %889 = vmatmul.mubr.f32.gmra.mxu0 %v753
        %v890 = vpop.f32.mrf.mxu0
        %v891 = vadd.f32 %v698, %v890
        %v892 = vpop.f32.mrf.mxu0
        %893 = vmatprep.mubr.f32.mxu0 0.0
        %894 = vmatmul.mubr.f32.gmra.mxu0 %v756
        %v895 = vpop.f32.mrf.mxu0
        %v896 = vadd.f32 %v703, %v895
        %v897 = vpop.f32.mrf.mxu0
        %898 = vmatprep.mubr.f32.mxu0 0.0
        %899 = vmatmul.mubr.f32.gmra.mxu0 %v759
        %v900 = vpop.f32.mrf.mxu0
        %v901 = vadd.f32 %v708, %v900
        %v902 = vpop.f32.mrf.mxu0
        %903 = vmatprep.mubr.f32.mxu0 0.0
        %904 = vmatmul.mubr.f32.gmra.mxu0 %v762
        %v905 = vpop.f32.mrf.mxu0
        %v906 = vadd.f32 %v713, %v905
        %v907 = vpop.f32.mrf.mxu0
        %908 = vdwg.mxu0
        %v909 = vld [vmem:[%s6] sm:$0x1]
        %v911 = vlaneseq
        %v912 = vshrl.u32 %v911, 7
        %v913 = vsub.s32 0, %v912
        %v914 = vrot.slane %v909, %v913
        %v916 = vadd.f32 %v831, %v914
        %v917 = vadd.f32 %v836, %v914
        %v918 = vadd.f32 %v841, %v914
        %v919 = vadd.f32 %v846, %v914
        %v920 = vadd.f32 %v851, %v914
        %v921 = vadd.f32 %v856, %v914
        %v922 = vadd.f32 %v861, %v914
        %v923 = vadd.f32 %v866, %v914
        %v924 = vadd.f32 %v871, %v914
        %v925 = vadd.f32 %v876, %v914
        %v926 = vadd.f32 %v881, %v914
        %v927 = vadd.f32 %v886, %v914
        %v928 = vadd.f32 %v891, %v914
        %v929 = vadd.f32 %v896, %v914
        %v930 = vadd.f32 %v901, %v914
        %v931 = vadd.f32 %v906, %v914
        %v932 = vmax.f32 %v916, 0.0
        %v933 = vmax.f32 %v917, 0.0
        %v934 = vmax.f32 %v918, 0.0
        %v935 = vmax.f32 %v919, 0.0
        %v936 = vmax.f32 %v920, 0.0
        %v937 = vmax.f32 %v921, 0.0
        %v938 = vmax.f32 %v922, 0.0
        %v939 = vmax.f32 %v923, 0.0
        %v940 = vmax.f32 %v924, 0.0
        %v941 = vmax.f32 %v925, 0.0
        %v942 = vmax.f32 %v926, 0.0
        %v943 = vmax.f32 %v927, 0.0
        %v944 = vmax.f32 %v928, 0.0
        %v945 = vmax.f32 %v929, 0.0
        %v946 = vmax.f32 %v930, 0.0
        %v947 = vmax.f32 %v931, 0.0
        %v948 = vld [vmem:[%s7] sm:$0xff]
        %v949 = vld [vmem:[%s7 + $0x8] sm:$0xff]
        %v950 = vld [vmem:[%s7 + $0x10] sm:$0xff]
        %v951 = vld [vmem:[%s7 + $0x18] sm:$0xff]
        %v952 = vld [vmem:[%s8] sm:$0x1]
        %v954 = vlaneseq
        %v955 = vshrl.u32 %v954, 7
        %v956 = vsub.s32 0, %v955
        %v957 = vrot.slane %v952, %v956
        %v960 = vsel %vm522, %v932, 0
        %v963 = vsel %vm522, %v933, 0
        %v966 = vsel %vm522, %v934, 0
        %v969 = vsel %vm522, %v935, 0
        %v972 = vsel %vm522, %v936, 0
        %v975 = vsel %vm522, %v937, 0
        %v978 = vsel %vm522, %v938, 0
        %v981 = vsel %vm522, %v939, 0
        %v984 = vsel %vm522, %v940, 0
        %v987 = vsel %vm522, %v941, 0
        %v990 = vsel %vm522, %v942, 0
        %v993 = vsel %vm522, %v943, 0
        %v996 = vsel %vm522, %v944, 0
        %v999 = vsel %vm522, %v945, 0
        %v1002 = vsel %vm522, %v946, 0
        %v1005 = vsel %vm522, %v947, 0
        %1007 = vmatprep.subr.mxu0 0.0
        %1008 = vmatpush1.msra.mxu0 0.0
        %1009 = vmatprep.subr.mxu0 0.0
        %1010 = vmatpush1.msra.mxu0 0.0
        %1011 = vmatprep.subr.mxu0 0.0
        %1012 = vmatpush1.msra.mxu0 0.0
        %1013 = vmatprep.subr.mxu0 0.0
        %1014 = vmatpush1.msra.mxu0 0.0
        %1015 = vmatprep.subr.mxu0 0.0
        %1016 = vmatpush1.msra.mxu0 0.0
        %1017 = vmatprep.subr.mxu0 0.0
        %1018 = vmatpush1.msra.mxu0 0.0
        %1019 = vmatprep.subr.mxu0 0.0
        %1020 = vmatpush1.msra.mxu0 0.0
        %1021 = vmatprep.subr.mxu0 0.0
        %1022 = vmatpush1.msra.mxu0 0.0
        %1023 = vmatprep.subr.mxu0 0.0
        %1024 = vmatpush1.msra.mxu0 0.0
        %1025 = vmatprep.subr.mxu0 0.0
        %1026 = vmatpush1.msra.mxu0 0.0
        %1027 = vmatprep.subr.mxu0 0.0
        %1028 = vmatpush1.msra.mxu0 0.0
        %1029 = vmatprep.subr.mxu0 0.0
        %1030 = vmatpush1.msra.mxu0 0.0
        %1031 = vmatprep.subr.mxu0 0.0
        %1032 = vmatpush1.msra.mxu0 %v951
        %1033 = vmatprep.subr.mxu0 0.0
        %1034 = vmatpush1.msra.mxu0 %v950
        %1035 = vmatprep.subr.mxu0 0.0
        %1036 = vmatpush1.msra.mxu0 %v949
        %1037 = vmatprep.subr.mxu0 0.0
        %1038 = vmatpush1.msra.mxu0 %v948
        %1039 = vmatprep.subr.mxu0 0.0
        %1040 = vmatpush2.msra.mxu0 0.0
        %1041 = vmatprep.subr.mxu0 0.0
        %1042 = vmatpush2.msra.mxu0 0.0
        %1043 = vmatprep.subr.mxu0 0.0
        %1044 = vmatpush2.msra.mxu0 0.0
        %1045 = vmatprep.subr.mxu0 0.0
        %1046 = vmatpush2.msra.mxu0 0.0
        %1047 = vmatprep.subr.mxu0 0.0
        %1048 = vmatpush2.msra.mxu0 0.0
        %1049 = vmatprep.subr.mxu0 0.0
        %1050 = vmatpush2.msra.mxu0 0.0
        %1051 = vmatprep.subr.mxu0 0.0
        %1052 = vmatpush2.msra.mxu0 0.0
        %1053 = vmatprep.subr.mxu0 0.0
        %1054 = vmatpush2.msra.mxu0 0.0
        %1055 = vmatprep.subr.mxu0 0.0
        %1056 = vmatpush2.msra.mxu0 0.0
        %1057 = vmatprep.subr.mxu0 0.0
        %1058 = vmatpush2.msra.mxu0 0.0
        %1059 = vmatprep.subr.mxu0 0.0
        %1060 = vmatpush2.msra.mxu0 0.0
        %1061 = vmatprep.subr.mxu0 0.0
        %1062 = vmatpush2.msra.mxu0 0.0
        %1063 = vmatprep.subr.mxu0 0.0
        %1064 = vmatpush2.msra.mxu0 0.0
        %1065 = vmatprep.subr.mxu0 0.0
        %1066 = vmatpush2.msra.mxu0 0.0
        %1067 = vmatprep.subr.mxu0 0.0
        %1068 = vmatpush2.msra.mxu0 0.0
        %1069 = vmatprep.subr.mxu0 0.0
        %1070 = vmatpush2.msra.mxu0 0.0
        %1071 = vmatprep.mubr.f32.mxu0 0.0
        %1072 = vmatmul.mubr.f32.gmra.mxu0 %v960
        %v1073 = vpop.f32.mrf.mxu0
        %v1074 = vadd.f32 %v957, %v1073
        %v1075 = vpop.f32.mrf.mxu0
        %1076 = vmatprep.mubr.f32.mxu0 0.0
        %1077 = vmatmul.mubr.f32.gmra.mxu0 %v963
        %v1078 = vpop.f32.mrf.mxu0
        %v1079 = vadd.f32 %v957, %v1078
        %v1080 = vpop.f32.mrf.mxu0
        %1081 = vmatprep.mubr.f32.mxu0 0.0
        %1082 = vmatmul.mubr.f32.gmra.mxu0 %v966
        %v1083 = vpop.f32.mrf.mxu0
        %v1084 = vadd.f32 %v957, %v1083
        %v1085 = vpop.f32.mrf.mxu0
        %1086 = vmatprep.mubr.f32.mxu0 0.0
        %1087 = vmatmul.mubr.f32.gmra.mxu0 %v969
        %v1088 = vpop.f32.mrf.mxu0
        %v1089 = vadd.f32 %v957, %v1088
        %v1090 = vpop.f32.mrf.mxu0
        %1091 = vmatprep.mubr.f32.mxu0 0.0
        %1092 = vmatmul.mubr.f32.gmra.mxu0 %v972
        %v1093 = vpop.f32.mrf.mxu0
        %v1094 = vadd.f32 %v957, %v1093
        %v1095 = vpop.f32.mrf.mxu0
        %1096 = vmatprep.mubr.f32.mxu0 0.0
        %1097 = vmatmul.mubr.f32.gmra.mxu0 %v975
        %v1098 = vpop.f32.mrf.mxu0
        %v1099 = vadd.f32 %v957, %v1098
        %v1100 = vpop.f32.mrf.mxu0
        %1101 = vmatprep.mubr.f32.mxu0 0.0
        %1102 = vmatmul.mubr.f32.gmra.mxu0 %v978
        %v1103 = vpop.f32.mrf.mxu0
        %v1104 = vadd.f32 %v957, %v1103
        %v1105 = vpop.f32.mrf.mxu0
        %1106 = vmatprep.mubr.f32.mxu0 0.0
        %1107 = vmatmul.mubr.f32.gmra.mxu0 %v981
        %v1108 = vpop.f32.mrf.mxu0
        %v1109 = vadd.f32 %v957, %v1108
        %v1110 = vpop.f32.mrf.mxu0
        %1111 = vmatprep.mubr.f32.mxu0 0.0
        %1112 = vmatmul.mubr.f32.gmra.mxu0 %v984
        %v1113 = vpop.f32.mrf.mxu0
        %v1114 = vadd.f32 %v957, %v1113
        %v1115 = vpop.f32.mrf.mxu0
        %1116 = vmatprep.mubr.f32.mxu0 0.0
        %1117 = vmatmul.mubr.f32.gmra.mxu0 %v987
        %v1118 = vpop.f32.mrf.mxu0
        %v1119 = vadd.f32 %v957, %v1118
        %v1120 = vpop.f32.mrf.mxu0
        %1121 = vmatprep.mubr.f32.mxu0 0.0
        %1122 = vmatmul.mubr.f32.gmra.mxu0 %v990
        %v1123 = vpop.f32.mrf.mxu0
        %v1124 = vadd.f32 %v957, %v1123
        %v1125 = vpop.f32.mrf.mxu0
        %1126 = vmatprep.mubr.f32.mxu0 0.0
        %1127 = vmatmul.mubr.f32.gmra.mxu0 %v993
        %v1128 = vpop.f32.mrf.mxu0
        %v1129 = vadd.f32 %v957, %v1128
        %v1130 = vpop.f32.mrf.mxu0
        %1131 = vmatprep.mubr.f32.mxu0 0.0
        %1132 = vmatmul.mubr.f32.gmra.mxu0 %v996
        %v1133 = vpop.f32.mrf.mxu0
        %v1134 = vadd.f32 %v957, %v1133
        %v1135 = vpop.f32.mrf.mxu0
        %1136 = vmatprep.mubr.f32.mxu0 0.0
        %1137 = vmatmul.mubr.f32.gmra.mxu0 %v999
        %v1138 = vpop.f32.mrf.mxu0
        %v1139 = vadd.f32 %v957, %v1138
        %v1140 = vpop.f32.mrf.mxu0
        %1141 = vmatprep.mubr.f32.mxu0 0.0
        %1142 = vmatmul.mubr.f32.gmra.mxu0 %v1002
        %v1143 = vpop.f32.mrf.mxu0
        %v1144 = vadd.f32 %v957, %v1143
        %v1145 = vpop.f32.mrf.mxu0
        %1146 = vmatprep.mubr.f32.mxu0 0.0
        %1147 = vmatmul.mubr.f32.gmra.mxu0 %v1005
        %v1148 = vpop.f32.mrf.mxu0
        %v1149 = vadd.f32 %v957, %v1148
        %v1150 = vpop.f32.mrf.mxu0
        %1151 = vdwg.mxu0
        %v1152 = vmax.f32 %v1074, 0.0
        %v1153 = vmax.f32 %v1079, 0.0
        %v1154 = vmax.f32 %v1084, 0.0
        %v1155 = vmax.f32 %v1089, 0.0
        %v1156 = vmax.f32 %v1094, 0.0
        %v1157 = vmax.f32 %v1099, 0.0
        %v1158 = vmax.f32 %v1104, 0.0
        %v1159 = vmax.f32 %v1109, 0.0
        %v1160 = vmax.f32 %v1114, 0.0
        %v1161 = vmax.f32 %v1119, 0.0
        %v1162 = vmax.f32 %v1124, 0.0
        %v1163 = vmax.f32 %v1129, 0.0
        %v1164 = vmax.f32 %v1134, 0.0
        %v1165 = vmax.f32 %v1139, 0.0
        %v1166 = vmax.f32 %v1144, 0.0
        %v1167 = vmax.f32 %v1149, 0.0
        %v1168 = vld [vmem:[%s9] sm:$0xff]
        %v1169 = vld [vmem:[%s9 + $0x8] sm:$0xff]
        %v1170 = vld [vmem:[%s10] sm:$0x1]
        %v1172 = vlaneseq
        %v1173 = vshrl.u32 %v1172, 7
        %v1174 = vsub.s32 0, %v1173
        %v1175 = vrot.slane %v1170, %v1174
        %vm1177 = vcmask 130048
        %v1179 = vsel %vm1177, %v1152, 0
        %v1182 = vsel %vm1177, %v1153, 0
        %v1185 = vsel %vm1177, %v1154, 0
        %v1188 = vsel %vm1177, %v1155, 0
        %v1191 = vsel %vm1177, %v1156, 0
        %v1194 = vsel %vm1177, %v1157, 0
        %v1197 = vsel %vm1177, %v1158, 0
        %v1200 = vsel %vm1177, %v1159, 0
        %v1203 = vsel %vm1177, %v1160, 0
        %v1206 = vsel %vm1177, %v1161, 0
        %v1209 = vsel %vm1177, %v1162, 0
        %v1212 = vsel %vm1177, %v1163, 0
        %v1215 = vsel %vm1177, %v1164, 0
        %v1218 = vsel %vm1177, %v1165, 0
        %v1221 = vsel %vm1177, %v1166, 0
        %v1224 = vsel %vm1177, %v1167, 0
        %1226 = vmatprep.subr.mxu0 0.0
        %1227 = vmatpush1.msra.mxu0 0.0
        %1228 = vmatprep.subr.mxu0 0.0
        %1229 = vmatpush1.msra.mxu0 0.0
        %1230 = vmatprep.subr.mxu0 0.0
        %1231 = vmatpush1.msra.mxu0 0.0
        %1232 = vmatprep.subr.mxu0 0.0
        %1233 = vmatpush1.msra.mxu0 0.0
        %1234 = vmatprep.subr.mxu0 0.0
        %1235 = vmatpush1.msra.mxu0 0.0
        %1236 = vmatprep.subr.mxu0 0.0
        %1237 = vmatpush1.msra.mxu0 0.0
        %1238 = vmatprep.subr.mxu0 0.0
        %1239 = vmatpush1.msra.mxu0 0.0
        %1240 = vmatprep.subr.mxu0 0.0
        %1241 = vmatpush1.msra.mxu0 0.0
        %1242 = vmatprep.subr.mxu0 0.0
        %1243 = vmatpush1.msra.mxu0 0.0
        %1244 = vmatprep.subr.mxu0 0.0
        %1245 = vmatpush1.msra.mxu0 0.0
        %1246 = vmatprep.subr.mxu0 0.0
        %1247 = vmatpush1.msra.mxu0 0.0
        %1248 = vmatprep.subr.mxu0 0.0
        %1249 = vmatpush1.msra.mxu0 0.0
        %1250 = vmatprep.subr.mxu0 0.0
        %1251 = vmatpush1.msra.mxu0 0.0
        %1252 = vmatprep.subr.mxu0 0.0
        %1253 = vmatpush1.msra.mxu0 0.0
        %1254 = vmatprep.subr.mxu0 0.0
        %1255 = vmatpush1.msra.mxu0 %v1169
        %1256 = vmatprep.subr.mxu0 0.0
        %1257 = vmatpush1.msra.mxu0 %v1168
        %1258 = vmatprep.subr.mxu0 0.0
        %1259 = vmatpush2.msra.mxu0 0.0
        %1260 = vmatprep.subr.mxu0 0.0
        %1261 = vmatpush2.msra.mxu0 0.0
        %1262 = vmatprep.subr.mxu0 0.0
        %1263 = vmatpush2.msra.mxu0 0.0
        %1264 = vmatprep.subr.mxu0 0.0
        %1265 = vmatpush2.msra.mxu0 0.0
        %1266 = vmatprep.subr.mxu0 0.0
        %1267 = vmatpush2.msra.mxu0 0.0
        %1268 = vmatprep.subr.mxu0 0.0
        %1269 = vmatpush2.msra.mxu0 0.0
        %1270 = vmatprep.subr.mxu0 0.0
        %1271 = vmatpush2.msra.mxu0 0.0
        %1272 = vmatprep.subr.mxu0 0.0
        %1273 = vmatpush2.msra.mxu0 0.0
        %1274 = vmatprep.subr.mxu0 0.0
        %1275 = vmatpush2.msra.mxu0 0.0
        %1276 = vmatprep.subr.mxu0 0.0
        %1277 = vmatpush2.msra.mxu0 0.0
        %1278 = vmatprep.subr.mxu0 0.0
        %1279 = vmatpush2.msra.mxu0 0.0
        %1280 = vmatprep.subr.mxu0 0.0
        %1281 = vmatpush2.msra.mxu0 0.0
        %1282 = vmatprep.subr.mxu0 0.0
        %1283 = vmatpush2.msra.mxu0 0.0
        %1284 = vmatprep.subr.mxu0 0.0
        %1285 = vmatpush2.msra.mxu0 0.0
        %1286 = vmatprep.subr.mxu0 0.0
        %1287 = vmatpush2.msra.mxu0 0.0
        %1288 = vmatprep.subr.mxu0 0.0
        %1289 = vmatpush2.msra.mxu0 0.0
        %1290 = vmatprep.mubr.f32.mxu0 0.0
        %1291 = vmatmul.mubr.f32.gmra.mxu0 %v1179
        %v1292 = vpop.f32.mrf.mxu0
        %v1293 = vadd.f32 %v1175, %v1292
        %v1294 = vpop.f32.mrf.mxu0
        %1295 = vmatprep.mubr.f32.mxu0 0.0
        %1296 = vmatmul.mubr.f32.gmra.mxu0 %v1182
        %v1297 = vpop.f32.mrf.mxu0
        %v1298 = vadd.f32 %v1175, %v1297
        %v1299 = vpop.f32.mrf.mxu0
        %1300 = vmatprep.mubr.f32.mxu0 0.0
        %1301 = vmatmul.mubr.f32.gmra.mxu0 %v1185
        %v1302 = vpop.f32.mrf.mxu0
        %v1303 = vadd.f32 %v1175, %v1302
        %v1304 = vpop.f32.mrf.mxu0
        %1305 = vmatprep.mubr.f32.mxu0 0.0
        %1306 = vmatmul.mubr.f32.gmra.mxu0 %v1188
        %v1307 = vpop.f32.mrf.mxu0
        %v1308 = vadd.f32 %v1175, %v1307
        %v1309 = vpop.f32.mrf.mxu0
        %1310 = vmatprep.mubr.f32.mxu0 0.0
        %1311 = vmatmul.mubr.f32.gmra.mxu0 %v1191
        %v1312 = vpop.f32.mrf.mxu0
        %v1313 = vadd.f32 %v1175, %v1312
        %v1314 = vpop.f32.mrf.mxu0
        %1315 = vmatprep.mubr.f32.mxu0 0.0
        %1316 = vmatmul.mubr.f32.gmra.mxu0 %v1194
        %v1317 = vpop.f32.mrf.mxu0
        %v1318 = vadd.f32 %v1175, %v1317
        %v1319 = vpop.f32.mrf.mxu0
        %1320 = vmatprep.mubr.f32.mxu0 0.0
        %1321 = vmatmul.mubr.f32.gmra.mxu0 %v1197
        %v1322 = vpop.f32.mrf.mxu0
        %v1323 = vadd.f32 %v1175, %v1322
        %v1324 = vpop.f32.mrf.mxu0
        %1325 = vmatprep.mubr.f32.mxu0 0.0
        %1326 = vmatmul.mubr.f32.gmra.mxu0 %v1200
        %v1327 = vpop.f32.mrf.mxu0
        %v1328 = vadd.f32 %v1175, %v1327
        %v1329 = vpop.f32.mrf.mxu0
        %1330 = vmatprep.mubr.f32.mxu0 0.0
        %1331 = vmatmul.mubr.f32.gmra.mxu0 %v1203
        %v1332 = vpop.f32.mrf.mxu0
        %v1333 = vadd.f32 %v1175, %v1332
        %v1334 = vpop.f32.mrf.mxu0
        %1335 = vmatprep.mubr.f32.mxu0 0.0
        %1336 = vmatmul.mubr.f32.gmra.mxu0 %v1206
        %v1337 = vpop.f32.mrf.mxu0
        %v1338 = vadd.f32 %v1175, %v1337
        %v1339 = vpop.f32.mrf.mxu0
        %1340 = vmatprep.mubr.f32.mxu0 0.0
        %1341 = vmatmul.mubr.f32.gmra.mxu0 %v1209
        %v1342 = vpop.f32.mrf.mxu0
        %v1343 = vadd.f32 %v1175, %v1342
        %v1344 = vpop.f32.mrf.mxu0
        %1345 = vmatprep.mubr.f32.mxu0 0.0
        %1346 = vmatmul.mubr.f32.gmra.mxu0 %v1212
        %v1347 = vpop.f32.mrf.mxu0
        %v1348 = vadd.f32 %v1175, %v1347
        %v1349 = vpop.f32.mrf.mxu0
        %1350 = vmatprep.mubr.f32.mxu0 0.0
        %1351 = vmatmul.mubr.f32.gmra.mxu0 %v1215
        %v1352 = vpop.f32.mrf.mxu0
        %v1353 = vadd.f32 %v1175, %v1352
        %v1354 = vpop.f32.mrf.mxu0
        %1355 = vmatprep.mubr.f32.mxu0 0.0
        %1356 = vmatmul.mubr.f32.gmra.mxu0 %v1218
        %v1357 = vpop.f32.mrf.mxu0
        %v1358 = vadd.f32 %v1175, %v1357
        %v1359 = vpop.f32.mrf.mxu0
        %1360 = vmatprep.mubr.f32.mxu0 0.0
        %1361 = vmatmul.mubr.f32.gmra.mxu0 %v1221
        %v1362 = vpop.f32.mrf.mxu0
        %v1363 = vadd.f32 %v1175, %v1362
        %v1364 = vpop.f32.mrf.mxu0
        %1365 = vmatprep.mubr.f32.mxu0 0.0
        %1366 = vmatmul.mubr.f32.gmra.mxu0 %v1224
        %v1367 = vpop.f32.mrf.mxu0
        %v1368 = vadd.f32 %v1175, %v1367
        %v1369 = vpop.f32.mrf.mxu0
        %1370 = vdwg.mxu0
        %v1371 = vmax.f32 %v1293, 0.0
        %v1372 = vmax.f32 %v1298, 0.0
        %v1373 = vmax.f32 %v1303, 0.0
        %v1374 = vmax.f32 %v1308, 0.0
        %v1375 = vmax.f32 %v1313, 0.0
        %v1376 = vmax.f32 %v1318, 0.0
        %v1377 = vmax.f32 %v1323, 0.0
        %v1378 = vmax.f32 %v1328, 0.0
        %v1379 = vmax.f32 %v1333, 0.0
        %v1380 = vmax.f32 %v1338, 0.0
        %v1381 = vmax.f32 %v1343, 0.0
        %v1382 = vmax.f32 %v1348, 0.0
        %v1383 = vmax.f32 %v1353, 0.0
        %v1384 = vmax.f32 %v1358, 0.0
        %v1385 = vmax.f32 %v1363, 0.0
        %v1386 = vmax.f32 %v1368, 0.0
        %v1387 = vld [vmem:[%s11] sm:$0xff]
        %vm1388 = vcmask 64512
        %v1390 = vsel %vm1388, %v1387, 0
        %v1393 = vsel %vm1388, %v1371, 0
        %v1396 = vsel %vm1388, %v1372, 0
        %v1399 = vsel %vm1388, %v1373, 0
        %v1402 = vsel %vm1388, %v1374, 0
        %v1405 = vsel %vm1388, %v1375, 0
        %v1408 = vsel %vm1388, %v1376, 0
        %v1411 = vsel %vm1388, %v1377, 0
        %v1414 = vsel %vm1388, %v1378, 0
        %v1417 = vsel %vm1388, %v1379, 0
        %v1420 = vsel %vm1388, %v1380, 0
        %v1423 = vsel %vm1388, %v1381, 0
        %v1426 = vsel %vm1388, %v1382, 0
        %v1429 = vsel %vm1388, %v1383, 0
        %v1432 = vsel %vm1388, %v1384, 0
        %v1435 = vsel %vm1388, %v1385, 0
        %v1438 = vsel %vm1388, %v1386, 0
        %1440 = vmatprep.subr.mxu0 0.0
        %1441 = vmatpush1.xpose.msra.mxu0 %v1438
        %1442 = vmatprep.subr.mxu0 0.0
        %1443 = vmatpush1.xpose.msra.mxu0 %v1435
        %1444 = vmatprep.subr.mxu0 0.0
        %1445 = vmatpush1.xpose.msra.mxu0 %v1432
        %1446 = vmatprep.subr.mxu0 0.0
        %1447 = vmatpush1.xpose.msra.mxu0 %v1429
        %1448 = vmatprep.subr.mxu0 0.0
        %1449 = vmatpush1.xpose.msra.mxu0 %v1426
        %1450 = vmatprep.subr.mxu0 0.0
        %1451 = vmatpush1.xpose.msra.mxu0 %v1423
        %1452 = vmatprep.subr.mxu0 0.0
        %1453 = vmatpush1.xpose.msra.mxu0 %v1420
        %1454 = vmatprep.subr.mxu0 0.0
        %1455 = vmatpush1.xpose.msra.mxu0 %v1417
        %1456 = vmatprep.subr.mxu0 0.0
        %1457 = vmatpush1.xpose.msra.mxu0 %v1414
        %1458 = vmatprep.subr.mxu0 0.0
        %1459 = vmatpush1.xpose.msra.mxu0 %v1411
        %1460 = vmatprep.subr.mxu0 0.0
        %1461 = vmatpush1.xpose.msra.mxu0 %v1408
        %1462 = vmatprep.subr.mxu0 0.0
        %1463 = vmatpush1.xpose.msra.mxu0 %v1405
        %1464 = vmatprep.subr.mxu0 0.0
        %1465 = vmatpush1.xpose.msra.mxu0 %v1402
        %1466 = vmatprep.subr.mxu0 0.0
        %1467 = vmatpush1.xpose.msra.mxu0 %v1399
        %1468 = vmatprep.subr.mxu0 0.0
        %1469 = vmatpush1.xpose.msra.mxu0 %v1396
        %1470 = vmatprep.subr.mxu0 0.0
        %1471 = vmatpush1.xpose.msra.mxu0 %v1393
        %1472 = vmatprep.subr.mxu0 0.0
        %1473 = vmatpush2.xpose.msra.mxu0 0.0
        %1474 = vmatprep.subr.mxu0 0.0
        %1475 = vmatpush2.xpose.msra.mxu0 0.0
        %1476 = vmatprep.subr.mxu0 0.0
        %1477 = vmatpush2.xpose.msra.mxu0 0.0
        %1478 = vmatprep.subr.mxu0 0.0
        %1479 = vmatpush2.xpose.msra.mxu0 0.0
        %1480 = vmatprep.subr.mxu0 0.0
        %1481 = vmatpush2.xpose.msra.mxu0 0.0
        %1482 = vmatprep.subr.mxu0 0.0
        %1483 = vmatpush2.xpose.msra.mxu0 0.0
        %1484 = vmatprep.subr.mxu0 0.0
        %1485 = vmatpush2.xpose.msra.mxu0 0.0
        %1486 = vmatprep.subr.mxu0 0.0
        %1487 = vmatpush2.xpose.msra.mxu0 0.0
        %1488 = vmatprep.subr.mxu0 0.0
        %1489 = vmatpush2.xpose.msra.mxu0 0.0
        %1490 = vmatprep.subr.mxu0 0.0
        %1491 = vmatpush2.xpose.msra.mxu0 0.0
        %1492 = vmatprep.subr.mxu0 0.0
        %1493 = vmatpush2.xpose.msra.mxu0 0.0
        %1494 = vmatprep.subr.mxu0 0.0
        %1495 = vmatpush2.xpose.msra.mxu0 0.0
        %1496 = vmatprep.subr.mxu0 0.0
        %1497 = vmatpush2.xpose.msra.mxu0 0.0
        %1498 = vmatprep.subr.mxu0 0.0
        %1499 = vmatpush2.xpose.msra.mxu0 0.0
        %1500 = vmatprep.subr.mxu0 0.0
        %1501 = vmatpush2.xpose.msra.mxu0 0.0
        %1502 = vmatprep.subr.mxu0 0.0
        %1503 = vmatpush2.xpose.msra.mxu0 0.0
        %1504 = vmatprep.mubr.f32.mxu0 0.0
        %1505 = vmatmul.mubr.f32.gmra.mxu0 %v1390
        %v1506 = vpop.f32.mrf.mxu0
        %v1507 = vadd.f32 0.0, %v1506
        %v1508 = vpop.f32.mrf.mxu0
        %1509 = vdwg.mxu0
        %v1510 = vld [vmem:[#allocation7] sm:$0x1]
        %1512 = vset.pattern.permute.xlu0 0
        %1513 = vperm.xlu0 %1512, %v1510
        %v1514 = vpop.permute.xlu0 %1513
        %v1516 = vlaneseq
        %v1517 = vshrl.u32 %v1516, 7
        %v1518 = vsub.s32 0, %v1517
        %v1519 = vrot.slane %v1514, %v1518
        %v1520 = vadd.f32 %v1507, %v1519
        %v1521 = vxor.u32 %v1520, 2147483648
        %v1522 = vmul.f32 %v1521, 1.442695
        %v1523 = vpow.pop %v1522
        %v1524 = vadd.f32 %v1523, 1.0
        %v1525 = vrcp.pop %v1524
        %v1526 = vmul.f32 1.0, %v1525
        %v1527 = vmul.f32 %v1526, 5.0
        %v1528 = vadd.f32 %v1527, 1.0
        %1529 = vst [vmem:[%s377] sm:$0x1] %v1528
        %s1530 = sand.u32 %s278, 1
        %s1531 = scalar_lea.sflag [#allocation9], %s1530
        %s1532 = sand.u32 %s278, 1
        %s1533 = scalar_lea.vmem [#allocation8], %s1532
        // Predicated region
        $region72: #{tpu_custom_call.1} parent=63 // pred_check
          %p1534 = pneg %p288
        $region73: #{tpu_custom_call.1} parent=63 // pred_check_branch
          %1536 = sbr.rel (%p1534) target = $region75
        $region74: #{tpu_custom_call.1} parent=63 // pred_region
          %s1538 = ssub.s32 16, 16
          %1539 = vsyncadd %s1531, %s1538
          %s1540 = smul.addr %s39, 16
          %s1541 = scalar_lea.hbm %s13, %s1540
          %s1543 = sshll.u32 %s1533, 4
          %s1544 = int_to_ptr.vmem [resolvable:$true] %s1543
          %1546 = dma.vmem_to_hbm [thread:$0]  %s1544, 16, %s1541, %s1531
        $region75: #{tpu_custom_call.1} parent=63 // pred_fallthru
          _
      $region64: #{tpu_custom_call.1} parent=5 // pred_fallthru
        _
      %p1547 = scmp.le.s32.totalorder 2, %s34
      // Predicated region
      $region76: #{tpu_custom_call.1} parent=5 // pred_check
        %p1548 = pneg %p1547
      $region77: #{tpu_custom_call.1} parent=5 // pred_check_branch
        %1550 = sbr.rel (%p1548) target = $region79
      $region78: #{tpu_custom_call.1} parent=5 // pred_region
        %s1551 = ssub.s32 %s34, 2
        // Predicated region
        $region80: #{tpu_custom_call.1} parent=78 // pred_check
          %p1552 = pneg %p294
        $region81: #{tpu_custom_call.1} parent=78 // pred_check_branch
          %1554 = sbr.rel (%p1552) target = $region83
        $region82: #{tpu_custom_call.1} parent=78 // pred_region
          %s1555 = sand.u32 %s279, 1
          %s1556 = scalar_lea.sflag [#allocation9], %s1555
          %s1557 = sand.u32 %s279, 1
          %s1558 = scalar_lea.vmem [#allocation8], %s1557
          %1559 = dma.done %s1556, 16
        $region83: #{tpu_custom_call.1} parent=78 // pred_fallthru
          _
      $region79: #{tpu_custom_call.1} parent=5 // pred_fallthru
        _
    $region6: #{tpu_custom_call.1} parent=1 // loop_footer
      %s38 = sadd.s32 1, %s34
    $region7: #{tpu_custom_call.1} parent=1 // loop_footer_branch
      %33 = sbr.rel target = $region3
    $region8: #{tpu_custom_call.1} parent=1 // loop_exit
      _
    %1560 = vsyncpa [#allocation9], 1
    %s1561 = scalar_lea.sflag [#allocation9], 1
    %1562 = vsyncpa %s1561, 1

</llo_original>
